<compile_context>
chip_gen: v5e
topology: v5e:2x2
jax: 0.10.0
libtpu: 0.0.40
codegen_flags: <defaults>
</compile_context>

<pallas_src>
import math

import jax
import jax.numpy as jnp
from jax.experimental import pallas as pl
from jax.experimental.pallas import tpu as pltpu

# ---- Model dimensions (SwinTransformer defaults at a small image size) ----
B = 2                         # batch
IN_CH = 3                     # input channels (module default)
IMG = 16                      # image height = width
PATCH = 4                     # PatchEmbed kernel = stride
GRID_HW = IMG // PATCH        # 4
N = GRID_HW * GRID_HW         # 16 tokens per image
C = 96                        # embed_dim
NUM_HEADS = 3
HEAD_DIM = C // NUM_HEADS     # 32
HIDDEN = 4 * C                # 384
NUM_CLASSES = 4
PATCH_FEAT = IN_CH * PATCH * PATCH   # 48
EPS = 1e-5                    # nn.LayerNorm default
VEC_W = HIDDEN                # packed-vector slab width (384 = 3 * 128 lanes)

# Row indices inside the packed parameter-vector slab.
(R_BPE, R_G1, R_B1, R_BQKV, R_BO, R_BM1, R_BM2, R_G2, R_B2, R_BFC) = range(10)


def _erf(x):
    # Abramowitz & Stegun 7.1.26 (max abs err ~1.5e-7): matches torch's exact
    # erf-GELU to float32 precision using only exp/mul/add (EUP/VPU friendly).
    # TODO(synk): switch to lax.erf if/when Mosaic lowers erf_p directly.
    p = 0.3275911
    a1, a2, a3, a4, a5 = (0.254829592, -0.284496736, 1.421413741,
                          -1.453152027, 1.061405429)
    s = jnp.where(x >= 0.0, 1.0, -1.0)
    z = jnp.abs(x)
    t = 1.0 / (1.0 + p * z)
    poly = ((((a5 * t + a4) * t + a3) * t + a2) * t + a1) * t
    return s * (1.0 - poly * jnp.exp(-z * z))


def _gelu(x):
    return 0.5 * x * (1.0 + _erf(x * (1.0 / math.sqrt(2.0))))


def _layernorm(x, g, b):
    mu = jnp.mean(x, axis=-1, keepdims=True)
    var = jnp.mean((x - mu) ** 2, axis=-1, keepdims=True)
    return (x - mu) * jax.lax.rsqrt(var + EPS) * g + b


def swin_transformer_kernel(patches_ref, wpe_ref, wqkv_ref, wo_ref,
                            w1_ref, w2_ref, wfc_ref, vec_ref, out_ref):
    f32 = jnp.float32

    def vec_row(r, width):
        return vec_ref[r:r + 1, :width]          # (1, width) static slice

    # --- PatchEmbed: im2col'd Conv2d(k=4, s=4) as one matmul.  Rows are already
    #     ordered (b * N + token), i.e. the flatten(2).transpose(1,2) layout. ---
    x = jnp.dot(patches_ref[...], wpe_ref[...], preferred_element_type=f32)
    x = x + vec_row(R_BPE, C)                    # (B*N, C)

    # --- SwinBlock: norm1 ---
    xn = _layernorm(x, vec_row(R_G1, C), vec_row(R_B1, C))

    # --- fused Q/K/V projection: one (B*N, C) x (C, 3C) MXU push ---
    qkv = jnp.dot(xn, wqkv_ref[...], preferred_element_type=f32)
    qkv = qkv + vec_row(R_BQKV, 3 * C)           # (B*N, 3C)

    # --- multi-head self-attention, batched over B via 3-D einsums;
    #     static 3-iteration loop over heads (32-lane slices). ---
    scale = 1.0 / math.sqrt(HEAD_DIM)
    head_outs = []
    for h in range(NUM_HEADS):
        lo = h * HEAD_DIM
        q_h = qkv[:, lo:lo + HEAD_DIM].reshape(B, N, HEAD_DIM)
        k_h = qkv[:, C + lo:C + lo + HEAD_DIM].reshape(B, N, HEAD_DIM)
        v_h = qkv[:, 2 * C + lo:2 * C + lo + HEAD_DIM].reshape(B, N, HEAD_DIM)
        s = jnp.einsum('bnd,bmd->bnm', q_h * scale, k_h,
                       preferred_element_type=f32)              # (B, N, N)
        s = s - jnp.max(s, axis=-1, keepdims=True)
        p = jnp.exp(s)
        p = p * pl.reciprocal(jnp.sum(p, axis=-1, keepdims=True), approx=True)
        o_h = jnp.einsum('bnm,bmd->bnd', p, v_h,
                         preferred_element_type=f32)            # (B, N, D)
        head_outs.append(o_h.reshape(B * N, HEAD_DIM))
    attn = jnp.concatenate(head_outs, axis=-1)                  # (B*N, C)
    attn = jnp.dot(attn, wo_ref[...], preferred_element_type=f32)
    attn = attn + vec_row(R_BO, C)

    # --- MLP: fc1 -> GELU -> fc2 ---
    h1 = jnp.dot(attn, w1_ref[...], preferred_element_type=f32)
    h1 = _gelu(h1 + vec_row(R_BM1, HIDDEN))
    m = jnp.dot(h1, w2_ref[...], preferred_element_type=f32) + vec_row(R_BM2, C)

    # --- residual exactly as the PyTorch forward: attn_out + norm2(mlp(attn_out)) ---
    y = attn + _layernorm(m, vec_row(R_G2, C), vec_row(R_B2, C))   # (B*N, C)

    # --- mean pool over tokens + classifier head ---
    pooled = jnp.mean(y.reshape(B, N, C), axis=1)               # (B, C)
    logits = jnp.dot(pooled, wfc_ref[...], preferred_element_type=f32)
    out_ref[...] = logits + vec_row(R_BFC, NUM_CLASSES)          # (B, 4)


# ----------------------------- wrapper ------------------------------------ #

def _extract_patches(x):
    """(B, Cin, H, W) -> (B*N, Cin*P*P) matching Conv2d(k=P, s=P) + flatten(2).T."""
    b, ci, hh, ww = x.shape
    gh, gw = hh // PATCH, ww // PATCH
    p = x.reshape(b, ci, gh, PATCH, gw, PATCH).transpose(0, 2, 4, 1, 3, 5)
    return p.reshape(b * gh * gw, ci * PATCH * PATCH)


def _pack_rows(vectors, width):
    rows = [jnp.pad(v.astype(jnp.float32), (0, width - v.shape[0]))
            for v in vectors]
    return jnp.stack(rows, axis=0)                               # (len, width)


def swin_transformer(x, params):
    (w_conv, b_conv, g1, beta1, w_in, b_in, w_o, b_o,
     w1, bm1, w2, bm2, g2, beta2, w_fc, b_fc) = params

    patches = _extract_patches(x)                                # (B*N, 48)
    w_pe = w_conv.reshape(C, PATCH_FEAT).T                       # (48, C)
    vec = _pack_rows([b_conv, g1, beta1, b_in, b_o, bm1, bm2, g2, beta2, b_fc],
                     VEC_W)                                      # (10, 384)

    args = (patches, w_pe, w_in.T, w_o.T, w1.T, w2.T, w_fc.T, vec)

    # Single kernel step, no grid: the whole working set (<1 MiB) lives in VMEM,
    # every operand is a full-array block (default BlockSpecs).
    return pl.pallas_call(
        swin_transformer_kernel,
        out_shape=jax.ShapeDtypeStruct((B, NUM_CLASSES), jnp.float32),
    )(*args)


# --------------------------- pure-JAX reference ---------------------------- #

def swin_transformer_ref(x, params):
    (w_conv, b_conv, g1, beta1, w_in, b_in, w_o, b_o,
     w1, bm1, w2, bm2, g2, beta2, w_fc, b_fc) = params

    y = jax.lax.conv_general_dilated(
        x, w_conv, window_strides=(PATCH, PATCH), padding='VALID',
        dimension_numbers=('NCHW', 'OIHW', 'NCHW'))
    y = y + b_conv[None, :, None, None]                          # (B, C, 4, 4)
    y = y.reshape(B, C, N).transpose(0, 2, 1)                    # (B, N, C)

    xn = _layernorm(y, g1, beta1)
    qkv = xn @ w_in.T + b_in
    q, k, v = jnp.split(qkv, 3, axis=-1)

    def split_heads(t):
        return t.reshape(B, N, NUM_HEADS, HEAD_DIM).transpose(0, 2, 1, 3)

    qh, kh, vh = split_heads(q), split_heads(k), split_heads(v)
    s = jnp.einsum('bhnd,bhmd->bhnm', qh * (1.0 / math.sqrt(HEAD_DIM)), kh)
    p = jax.nn.softmax(s, axis=-1)
    o = jnp.einsum('bhnm,bhmd->bhnd', p, vh)
    o = o.transpose(0, 2, 1, 3).reshape(B, N, C)
    attn = o @ w_o.T + b_o

    h1 = attn @ w1.T + bm1
    h1 = 0.5 * h1 * (1.0 + jax.scipy.special.erf(h1 / math.sqrt(2.0)))
    m = h1 @ w2.T + bm2
    blk = attn + _layernorm(m, g2, beta2)

    pooled = blk.mean(axis=1)
    return pooled @ w_fc.T + b_fc


def make_params(key):
    ks = jax.random.split(key, 16)
    f32 = jnp.float32
    w_conv = 0.05 * jax.random.normal(ks[0], (C, IN_CH, PATCH, PATCH), f32)
    b_conv = 0.02 * jax.random.normal(ks[1], (C,), f32)
    g1 = 1.0 + 0.1 * jax.random.normal(ks[2], (C,), f32)
    beta1 = 0.02 * jax.random.normal(ks[3], (C,), f32)
    w_in = 0.05 * jax.random.normal(ks[4], (3 * C, C), f32)
    b_in = 0.02 * jax.random.normal(ks[5], (3 * C,), f32)
    w_o = 0.05 * jax.random.normal(ks[6], (C, C), f32)
    b_o = 0.02 * jax.random.normal(ks[7], (C,), f32)
    w1 = 0.05 * jax.random.normal(ks[8], (HIDDEN, C), f32)
    bm1 = 0.02 * jax.random.normal(ks[9], (HIDDEN,), f32)
    w2 = 0.05 * jax.random.normal(ks[10], (C, HIDDEN), f32)
    bm2 = 0.02 * jax.random.normal(ks[11], (C,), f32)
    g2 = 1.0 + 0.1 * jax.random.normal(ks[12], (C,), f32)
    beta2 = 0.02 * jax.random.normal(ks[13], (C,), f32)
    w_fc = 0.05 * jax.random.normal(ks[14], (NUM_CLASSES, C), f32)
    b_fc = 0.02 * jax.random.normal(ks[15], (NUM_CLASSES,), f32)
    return (w_conv, b_conv, g1, beta1, w_in, b_in, w_o, b_o,
            w1, bm1, w2, bm2, g2, beta2, w_fc, b_fc)


if __name__ == "__main__":
    key = jax.random.PRNGKey(0)
    kx, kp = jax.random.split(key)
    x = jax.random.normal(kx, (B, IN_CH, IMG, IMG), jnp.float32)
    params = make_params(kp)

    out = jax.block_until_ready(swin_transformer(x, params))
    ref = swin_transformer_ref(x, params)

    assert out.shape == (B, NUM_CLASSES)
    assert bool(jnp.all(jnp.isfinite(out)))
    max_err = float(jnp.max(jnp.abs(out - ref)))
    # 2e-3 tolerance accounts for the approx EUP reciprocal in the softmax.
    assert bool(jnp.allclose(out, ref, atol=2e-3, rtol=2e-3)), max_err
    print("KERNEL_OK")
</pallas_src>

<mosaic_0001>
module attributes {stable_mosaic.version = 11 : i64} {
  func.func @swin_transformer_kernel(%arg0: memref<32x48xf32, #tpu.memory_space<vmem>>, %arg1: memref<48x96xf32, #tpu.memory_space<vmem>>, %arg2: memref<96x288xf32, #tpu.memory_space<vmem>>, %arg3: memref<96x96xf32, #tpu.memory_space<vmem>>, %arg4: memref<96x384xf32, #tpu.memory_space<vmem>>, %arg5: memref<384x96xf32, #tpu.memory_space<vmem>>, %arg6: memref<96x4xf32, #tpu.memory_space<vmem>>, %arg7: memref<10x384xf32, #tpu.memory_space<vmem>>, %arg8: memref<2x4xf32, #tpu.memory_space<vmem>>) attributes {dimension_semantics = [], scalar_prefetch = 0 : i64, scratch_operands = 0 : i64, tpu.core_type = #tpu.core_type<tc>} {
    %c0 = arith.constant 0 : index
    %c0_0 = arith.constant 0 : index
    %0 = vector.load %arg0[%c0, %c0_0] : memref<32x48xf32, #tpu.memory_space<vmem>>, vector<32x48xf32>
    %c0_1 = arith.constant 0 : index
    %c0_2 = arith.constant 0 : index
    %1 = vector.load %arg1[%c0_1, %c0_2] : memref<48x96xf32, #tpu.memory_space<vmem>>, vector<48x96xf32>
    %cst = arith.constant dense<0.000000e+00> : vector<32x96xf32>
    %2 = tpu.matmul %0, %1, %cst {dimension_numbers = #tpu.dot_dimension_numbers<[1], [0], [0], [1], [0, 0, 1, 1], [], []>} : vector<32x48xf32>, vector<48x96xf32>, vector<32x96xf32> -> vector<32x96xf32>
    %c0_3 = arith.constant 0 : index
    %c0_4 = arith.constant 0 : index
    %3 = vector.load %arg7[%c0_3, %c0_4] : memref<10x384xf32, #tpu.memory_space<vmem>>, vector<1x96xf32>
    %4 = vector.broadcast %3 : vector<1x96xf32> to vector<32x96xf32>
    %5 = arith.addf %2, %4 : vector<32x96xf32>
    %c1 = arith.constant 1 : index
    %c0_5 = arith.constant 0 : index
    %6 = vector.load %arg7[%c1, %c0_5] : memref<10x384xf32, #tpu.memory_space<vmem>>, vector<1x96xf32>
    %c2 = arith.constant 2 : index
    %c0_6 = arith.constant 0 : index
    %7 = vector.load %arg7[%c2, %c0_6] : memref<10x384xf32, #tpu.memory_space<vmem>>, vector<1x96xf32>
    %cst_7 = arith.constant dense<0.000000e+00> : vector<32xf32>
    %8 = vector.multi_reduction <add>, %5, %cst_7 [1] : vector<32x96xf32> to vector<32xf32>
    %9 = vector.shape_cast %8 : vector<32xf32> to vector<32x1xf32>
    %cst_8 = arith.constant 9.600000e+01 : f32
    %10 = vector.broadcast %cst_8 : f32 to vector<32x1xf32>
    %11 = arith.divf %9, %10 : vector<32x1xf32>
    %12 = vector.broadcast %11 : vector<32x1xf32> to vector<32x96xf32>
    %13 = arith.subf %5, %12 : vector<32x96xf32>
    %14 = arith.mulf %13, %13 : vector<32x96xf32>
    %cst_9 = arith.constant dense<0.000000e+00> : vector<32xf32>
    %15 = vector.multi_reduction <add>, %14, %cst_9 [1] : vector<32x96xf32> to vector<32xf32>
    %16 = vector.shape_cast %15 : vector<32xf32> to vector<32x1xf32>
    %cst_10 = arith.constant 9.600000e+01 : f32
    %17 = vector.broadcast %cst_10 : f32 to vector<32x1xf32>
    %18 = arith.divf %16, %17 : vector<32x1xf32>
    %19 = vector.broadcast %11 : vector<32x1xf32> to vector<32x96xf32>
    %20 = arith.subf %5, %19 : vector<32x96xf32>
    %cst_11 = arith.constant 9.99999974E-6 : f32
    %21 = vector.broadcast %cst_11 : f32 to vector<32x1xf32>
    %22 = arith.addf %18, %21 : vector<32x1xf32>
    %23 = math.rsqrt %22 : vector<32x1xf32>
    %24 = vector.broadcast %23 : vector<32x1xf32> to vector<32x96xf32>
    %25 = arith.mulf %20, %24 : vector<32x96xf32>
    %26 = vector.broadcast %6 : vector<1x96xf32> to vector<32x96xf32>
    %27 = arith.mulf %25, %26 : vector<32x96xf32>
    %28 = vector.broadcast %7 : vector<1x96xf32> to vector<32x96xf32>
    %29 = arith.addf %27, %28 : vector<32x96xf32>
    %c0_12 = arith.constant 0 : index
    %c0_13 = arith.constant 0 : index
    %30 = vector.load %arg2[%c0_12, %c0_13] : memref<96x288xf32, #tpu.memory_space<vmem>>, vector<96x288xf32>
    %cst_14 = arith.constant dense<0.000000e+00> : vector<32x288xf32>
    %31 = tpu.matmul %29, %30, %cst_14 {dimension_numbers = #tpu.dot_dimension_numbers<[1], [0], [0], [1], [0, 0, 1, 1], [], []>} : vector<32x96xf32>, vector<96x288xf32>, vector<32x288xf32> -> vector<32x288xf32>
    %c3 = arith.constant 3 : index
    %c0_15 = arith.constant 0 : index
    %32 = vector.load %arg7[%c3, %c0_15] : memref<10x384xf32, #tpu.memory_space<vmem>>, vector<1x288xf32>
    %33 = vector.broadcast %32 : vector<1x288xf32> to vector<32x288xf32>
    %34 = arith.addf %31, %33 : vector<32x288xf32>
    %35 = vector.extract_strided_slice %34 {offsets = [0, 0], sizes = [32, 32], strides = [1, 1]} : vector<32x288xf32> to vector<32x32xf32>
    %36 = vector.shape_cast %35 : vector<32x32xf32> to vector<2x16x32xf32>
    %37 = vector.extract_strided_slice %34 {offsets = [0, 96], sizes = [32, 32], strides = [1, 1]} : vector<32x288xf32> to vector<32x32xf32>
    %38 = vector.shape_cast %37 : vector<32x32xf32> to vector<2x16x32xf32>
    %39 = vector.extract_strided_slice %34 {offsets = [0, 192], sizes = [32, 32], strides = [1, 1]} : vector<32x288xf32> to vector<32x32xf32>
    %40 = vector.shape_cast %39 : vector<32x32xf32> to vector<2x16x32xf32>
    %cst_16 = arith.constant 0.176776692 : f32
    %41 = vector.broadcast %cst_16 : f32 to vector<2x16x32xf32>
    %42 = arith.mulf %36, %41 : vector<2x16x32xf32>
    "tpu.trace_start"() <{level = 10 : i32, message = "bnd,bmd->bnm"}> : () -> ()
    %cst_17 = arith.constant dense<0.000000e+00> : vector<2x16x16xf32>
    %43 = tpu.matmul %42, %38, %cst_17 {dimension_numbers = #tpu.dot_dimension_numbers<[2], [2], [1], [1], [0, 0, 0, 1, 1, 1], [0], [0]>} : vector<2x16x32xf32>, vector<2x16x32xf32>, vector<2x16x16xf32> -> vector<2x16x16xf32>
    "tpu.trace_stop"() : () -> ()
    %cst_18 = arith.constant dense<0xFF800000> : vector<2x16xf32>
    %44 = vector.multi_reduction <maximumf>, %43, %cst_18 [2] : vector<2x16x16xf32> to vector<2x16xf32>
    %45 = vector.shape_cast %44 : vector<2x16xf32> to vector<2x16x1xf32>
    %46 = vector.broadcast %45 : vector<2x16x1xf32> to vector<2x16x16xf32>
    %47 = arith.subf %43, %46 : vector<2x16x16xf32>
    %48 = math.exp %47 : vector<2x16x16xf32>
    %cst_19 = arith.constant dense<0.000000e+00> : vector<2x16xf32>
    %49 = vector.multi_reduction <add>, %48, %cst_19 [2] : vector<2x16x16xf32> to vector<2x16xf32>
    %50 = vector.shape_cast %49 : vector<2x16xf32> to vector<2x16x1xf32>
    %51 = tpu.reciprocal %50 {approx = true} : vector<2x16x1xf32> -> vector<2x16x1xf32>
    %52 = vector.broadcast %51 : vector<2x16x1xf32> to vector<2x16x16xf32>
    %53 = arith.mulf %48, %52 : vector<2x16x16xf32>
    "tpu.trace_start"() <{level = 10 : i32, message = "bnm,bmd->bnd"}> : () -> ()
    %cst_20 = arith.constant dense<0.000000e+00> : vector<2x16x32xf32>
    %54 = tpu.matmul %53, %40, %cst_20 {dimension_numbers = #tpu.dot_dimension_numbers<[2], [1], [1], [2], [0, 0, 0, 1, 1, 2], [0], [0]>} : vector<2x16x16xf32>, vector<2x16x32xf32>, vector<2x16x32xf32> -> vector<2x16x32xf32>
    "tpu.trace_stop"() : () -> ()
    %55 = vector.shape_cast %54 : vector<2x16x32xf32> to vector<32x32xf32>
    %56 = vector.extract_strided_slice %34 {offsets = [0, 32], sizes = [32, 32], strides = [1, 1]} : vector<32x288xf32> to vector<32x32xf32>
    %57 = vector.shape_cast %56 : vector<32x32xf32> to vector<2x16x32xf32>
    %58 = vector.extract_strided_slice %34 {offsets = [0, 128], sizes = [32, 32], strides = [1, 1]} : vector<32x288xf32> to vector<32x32xf32>
    %59 = vector.shape_cast %58 : vector<32x32xf32> to vector<2x16x32xf32>
    %60 = vector.extract_strided_slice %34 {offsets = [0, 224], sizes = [32, 32], strides = [1, 1]} : vector<32x288xf32> to vector<32x32xf32>
    %61 = vector.shape_cast %60 : vector<32x32xf32> to vector<2x16x32xf32>
    %cst_21 = arith.constant 0.176776692 : f32
    %62 = vector.broadcast %cst_21 : f32 to vector<2x16x32xf32>
    %63 = arith.mulf %57, %62 : vector<2x16x32xf32>
    "tpu.trace_start"() <{level = 10 : i32, message = "bnd,bmd->bnm"}> : () -> ()
    %cst_22 = arith.constant dense<0.000000e+00> : vector<2x16x16xf32>
    %64 = tpu.matmul %63, %59, %cst_22 {dimension_numbers = #tpu.dot_dimension_numbers<[2], [2], [1], [1], [0, 0, 0, 1, 1, 1], [0], [0]>} : vector<2x16x32xf32>, vector<2x16x32xf32>, vector<2x16x16xf32> -> vector<2x16x16xf32>
    "tpu.trace_stop"() : () -> ()
    %cst_23 = arith.constant dense<0xFF800000> : vector<2x16xf32>
    %65 = vector.multi_reduction <maximumf>, %64, %cst_23 [2] : vector<2x16x16xf32> to vector<2x16xf32>
    %66 = vector.shape_cast %65 : vector<2x16xf32> to vector<2x16x1xf32>
    %67 = vector.broadcast %66 : vector<2x16x1xf32> to vector<2x16x16xf32>
    %68 = arith.subf %64, %67 : vector<2x16x16xf32>
    %69 = math.exp %68 : vector<2x16x16xf32>
    %cst_24 = arith.constant dense<0.000000e+00> : vector<2x16xf32>
    %70 = vector.multi_reduction <add>, %69, %cst_24 [2] : vector<2x16x16xf32> to vector<2x16xf32>
    %71 = vector.shape_cast %70 : vector<2x16xf32> to vector<2x16x1xf32>
    %72 = tpu.reciprocal %71 {approx = true} : vector<2x16x1xf32> -> vector<2x16x1xf32>
    %73 = vector.broadcast %72 : vector<2x16x1xf32> to vector<2x16x16xf32>
    %74 = arith.mulf %69, %73 : vector<2x16x16xf32>
    "tpu.trace_start"() <{level = 10 : i32, message = "bnm,bmd->bnd"}> : () -> ()
    %cst_25 = arith.constant dense<0.000000e+00> : vector<2x16x32xf32>
    %75 = tpu.matmul %74, %61, %cst_25 {dimension_numbers = #tpu.dot_dimension_numbers<[2], [1], [1], [2], [0, 0, 0, 1, 1, 2], [0], [0]>} : vector<2x16x16xf32>, vector<2x16x32xf32>, vector<2x16x32xf32> -> vector<2x16x32xf32>
    "tpu.trace_stop"() : () -> ()
    %76 = vector.shape_cast %75 : vector<2x16x32xf32> to vector<32x32xf32>
    %77 = vector.extract_strided_slice %34 {offsets = [0, 64], sizes = [32, 32], strides = [1, 1]} : vector<32x288xf32> to vector<32x32xf32>
    %78 = vector.shape_cast %77 : vector<32x32xf32> to vector<2x16x32xf32>
    %79 = vector.extract_strided_slice %34 {offsets = [0, 160], sizes = [32, 32], strides = [1, 1]} : vector<32x288xf32> to vector<32x32xf32>
    %80 = vector.shape_cast %79 : vector<32x32xf32> to vector<2x16x32xf32>
    %81 = vector.extract_strided_slice %34 {offsets = [0, 256], sizes = [32, 32], strides = [1, 1]} : vector<32x288xf32> to vector<32x32xf32>
    %82 = vector.shape_cast %81 : vector<32x32xf32> to vector<2x16x32xf32>
    %cst_26 = arith.constant 0.176776692 : f32
    %83 = vector.broadcast %cst_26 : f32 to vector<2x16x32xf32>
    %84 = arith.mulf %78, %83 : vector<2x16x32xf32>
    "tpu.trace_start"() <{level = 10 : i32, message = "bnd,bmd->bnm"}> : () -> ()
    %cst_27 = arith.constant dense<0.000000e+00> : vector<2x16x16xf32>
    %85 = tpu.matmul %84, %80, %cst_27 {dimension_numbers = #tpu.dot_dimension_numbers<[2], [2], [1], [1], [0, 0, 0, 1, 1, 1], [0], [0]>} : vector<2x16x32xf32>, vector<2x16x32xf32>, vector<2x16x16xf32> -> vector<2x16x16xf32>
    "tpu.trace_stop"() : () -> ()
    %cst_28 = arith.constant dense<0xFF800000> : vector<2x16xf32>
    %86 = vector.multi_reduction <maximumf>, %85, %cst_28 [2] : vector<2x16x16xf32> to vector<2x16xf32>
    %87 = vector.shape_cast %86 : vector<2x16xf32> to vector<2x16x1xf32>
    %88 = vector.broadcast %87 : vector<2x16x1xf32> to vector<2x16x16xf32>
    %89 = arith.subf %85, %88 : vector<2x16x16xf32>
    %90 = math.exp %89 : vector<2x16x16xf32>
    %cst_29 = arith.constant dense<0.000000e+00> : vector<2x16xf32>
    %91 = vector.multi_reduction <add>, %90, %cst_29 [2] : vector<2x16x16xf32> to vector<2x16xf32>
    %92 = vector.shape_cast %91 : vector<2x16xf32> to vector<2x16x1xf32>
    %93 = tpu.reciprocal %92 {approx = true} : vector<2x16x1xf32> -> vector<2x16x1xf32>
    %94 = vector.broadcast %93 : vector<2x16x1xf32> to vector<2x16x16xf32>
    %95 = arith.mulf %90, %94 : vector<2x16x16xf32>
    "tpu.trace_start"() <{level = 10 : i32, message = "bnm,bmd->bnd"}> : () -> ()
    %cst_30 = arith.constant dense<0.000000e+00> : vector<2x16x32xf32>
    %96 = tpu.matmul %95, %82, %cst_30 {dimension_numbers = #tpu.dot_dimension_numbers<[2], [1], [1], [2], [0, 0, 0, 1, 1, 2], [0], [0]>} : vector<2x16x16xf32>, vector<2x16x32xf32>, vector<2x16x32xf32> -> vector<2x16x32xf32>
    "tpu.trace_stop"() : () -> ()
    %97 = vector.shape_cast %96 : vector<2x16x32xf32> to vector<32x32xf32>
    %98 = tpu.concatenate %55, %76, %97 in 1 : vector<32x32xf32>, vector<32x32xf32>, vector<32x32xf32> -> vector<32x96xf32>
    %c0_31 = arith.constant 0 : index
    %c0_32 = arith.constant 0 : index
    %99 = vector.load %arg3[%c0_31, %c0_32] : memref<96x96xf32, #tpu.memory_space<vmem>>, vector<96x96xf32>
    %cst_33 = arith.constant dense<0.000000e+00> : vector<32x96xf32>
    %100 = tpu.matmul %98, %99, %cst_33 {dimension_numbers = #tpu.dot_dimension_numbers<[1], [0], [0], [1], [0, 0, 1, 1], [], []>} : vector<32x96xf32>, vector<96x96xf32>, vector<32x96xf32> -> vector<32x96xf32>
    %c4 = arith.constant 4 : index
    %c0_34 = arith.constant 0 : index
    %101 = vector.load %arg7[%c4, %c0_34] : memref<10x384xf32, #tpu.memory_space<vmem>>, vector<1x96xf32>
    %102 = vector.broadcast %101 : vector<1x96xf32> to vector<32x96xf32>
    %103 = arith.addf %100, %102 : vector<32x96xf32>
    %c0_35 = arith.constant 0 : index
    %c0_36 = arith.constant 0 : index
    %104 = vector.load %arg4[%c0_35, %c0_36] : memref<96x384xf32, #tpu.memory_space<vmem>>, vector<96x384xf32>
    %cst_37 = arith.constant dense<0.000000e+00> : vector<32x384xf32>
    %105 = tpu.matmul %103, %104, %cst_37 {dimension_numbers = #tpu.dot_dimension_numbers<[1], [0], [0], [1], [0, 0, 1, 1], [], []>} : vector<32x96xf32>, vector<96x384xf32>, vector<32x384xf32> -> vector<32x384xf32>
    %c5 = arith.constant 5 : index
    %c0_38 = arith.constant 0 : index
    %106 = vector.load %arg7[%c5, %c0_38] : memref<10x384xf32, #tpu.memory_space<vmem>>, vector<1x384xf32>
    %107 = vector.broadcast %106 : vector<1x384xf32> to vector<32x384xf32>
    %108 = arith.addf %105, %107 : vector<32x384xf32>
    %cst_39 = arith.constant 5.000000e-01 : f32
    %109 = vector.broadcast %cst_39 : f32 to vector<32x384xf32>
    %110 = arith.mulf %109, %108 : vector<32x384xf32>
    %cst_40 = arith.constant 0.707106769 : f32
    %111 = vector.broadcast %cst_40 : f32 to vector<32x384xf32>
    %112 = arith.mulf %108, %111 : vector<32x384xf32>
    %cst_41 = arith.constant 0.000000e+00 : f32
    %113 = vector.broadcast %cst_41 : f32 to vector<32x384xf32>
    %114 = arith.cmpf oge, %112, %113 : vector<32x384xf32>
    %cst_42 = arith.constant 1.000000e+00 : f32
    %cst_43 = arith.constant -1.000000e+00 : f32
    %115 = vector.broadcast %cst_42 : f32 to vector<32x384xf32>
    %116 = vector.broadcast %cst_43 : f32 to vector<32x384xf32>
    %117 = arith.select %114, %115, %116 : vector<32x384xi1>, vector<32x384xf32>
    %118 = math.absf %112 : vector<32x384xf32>
    %cst_44 = arith.constant 0.327591091 : f32
    %119 = vector.broadcast %cst_44 : f32 to vector<32x384xf32>
    %120 = arith.mulf %119, %118 : vector<32x384xf32>
    %cst_45 = arith.constant 1.000000e+00 : f32
    %121 = vector.broadcast %cst_45 : f32 to vector<32x384xf32>
    %122 = arith.addf %121, %120 : vector<32x384xf32>
    %cst_46 = arith.constant 1.000000e+00 : f32
    %123 = vector.broadcast %cst_46 : f32 to vector<32x384xf32>
    %124 = arith.divf %123, %122 : vector<32x384xf32>
    %cst_47 = arith.constant 1.06140542 : f32
    %125 = vector.broadcast %cst_47 : f32 to vector<32x384xf32>
    %126 = arith.mulf %125, %124 : vector<32x384xf32>
    %cst_48 = arith.constant -1.45315206 : f32
    %127 = vector.broadcast %cst_48 : f32 to vector<32x384xf32>
    %128 = arith.addf %126, %127 : vector<32x384xf32>
    %129 = arith.mulf %128, %124 : vector<32x384xf32>
    %cst_49 = arith.constant 1.42141378 : f32
    %130 = vector.broadcast %cst_49 : f32 to vector<32x384xf32>
    %131 = arith.addf %129, %130 : vector<32x384xf32>
    %132 = arith.mulf %131, %124 : vector<32x384xf32>
    %cst_50 = arith.constant -0.284496725 : f32
    %133 = vector.broadcast %cst_50 : f32 to vector<32x384xf32>
    %134 = arith.addf %132, %133 : vector<32x384xf32>
    %135 = arith.mulf %134, %124 : vector<32x384xf32>
    %cst_51 = arith.constant 0.254829586 : f32
    %136 = vector.broadcast %cst_51 : f32 to vector<32x384xf32>
    %137 = arith.addf %135, %136 : vector<32x384xf32>
    %138 = arith.mulf %137, %124 : vector<32x384xf32>
    %cst_52 = arith.constant 0.000000e+00 : f32
    %139 = vector.broadcast %cst_52 : f32 to vector<32x384xf32>
    %140 = arith.subf %139, %118 : vector<32x384xf32>
    %141 = arith.mulf %140, %118 : vector<32x384xf32>
    %142 = math.exp %141 : vector<32x384xf32>
    %143 = arith.mulf %138, %142 : vector<32x384xf32>
    %cst_53 = arith.constant 1.000000e+00 : f32
    %144 = vector.broadcast %cst_53 : f32 to vector<32x384xf32>
    %145 = arith.subf %144, %143 : vector<32x384xf32>
    %146 = arith.mulf %117, %145 : vector<32x384xf32>
    %cst_54 = arith.constant 1.000000e+00 : f32
    %147 = vector.broadcast %cst_54 : f32 to vector<32x384xf32>
    %148 = arith.addf %147, %146 : vector<32x384xf32>
    %149 = arith.mulf %110, %148 : vector<32x384xf32>
    %c0_55 = arith.constant 0 : index
    %c0_56 = arith.constant 0 : index
    %150 = vector.load %arg5[%c0_55, %c0_56] : memref<384x96xf32, #tpu.memory_space<vmem>>, vector<384x96xf32>
    %cst_57 = arith.constant dense<0.000000e+00> : vector<32x96xf32>
    %151 = tpu.matmul %149, %150, %cst_57 {dimension_numbers = #tpu.dot_dimension_numbers<[1], [0], [0], [1], [0, 0, 1, 1], [], []>} : vector<32x384xf32>, vector<384x96xf32>, vector<32x96xf32> -> vector<32x96xf32>
    %c6 = arith.constant 6 : index
    %c0_58 = arith.constant 0 : index
    %152 = vector.load %arg7[%c6, %c0_58] : memref<10x384xf32, #tpu.memory_space<vmem>>, vector<1x96xf32>
    %153 = vector.broadcast %152 : vector<1x96xf32> to vector<32x96xf32>
    %154 = arith.addf %151, %153 : vector<32x96xf32>
    %c7 = arith.constant 7 : index
    %c0_59 = arith.constant 0 : index
    %155 = vector.load %arg7[%c7, %c0_59] : memref<10x384xf32, #tpu.memory_space<vmem>>, vector<1x96xf32>
    %c8 = arith.constant 8 : index
    %c0_60 = arith.constant 0 : index
    %156 = vector.load %arg7[%c8, %c0_60] : memref<10x384xf32, #tpu.memory_space<vmem>>, vector<1x96xf32>
    %cst_61 = arith.constant dense<0.000000e+00> : vector<32xf32>
    %157 = vector.multi_reduction <add>, %154, %cst_61 [1] : vector<32x96xf32> to vector<32xf32>
    %158 = vector.shape_cast %157 : vector<32xf32> to vector<32x1xf32>
    %cst_62 = arith.constant 9.600000e+01 : f32
    %159 = vector.broadcast %cst_62 : f32 to vector<32x1xf32>
    %160 = arith.divf %158, %159 : vector<32x1xf32>
    %161 = vector.broadcast %160 : vector<32x1xf32> to vector<32x96xf32>
    %162 = arith.subf %154, %161 : vector<32x96xf32>
    %163 = arith.mulf %162, %162 : vector<32x96xf32>
    %cst_63 = arith.constant dense<0.000000e+00> : vector<32xf32>
    %164 = vector.multi_reduction <add>, %163, %cst_63 [1] : vector<32x96xf32> to vector<32xf32>
    %165 = vector.shape_cast %164 : vector<32xf32> to vector<32x1xf32>
    %cst_64 = arith.constant 9.600000e+01 : f32
    %166 = vector.broadcast %cst_64 : f32 to vector<32x1xf32>
    %167 = arith.divf %165, %166 : vector<32x1xf32>
    %168 = vector.broadcast %160 : vector<32x1xf32> to vector<32x96xf32>
    %169 = arith.subf %154, %168 : vector<32x96xf32>
    %cst_65 = arith.constant 9.99999974E-6 : f32
    %170 = vector.broadcast %cst_65 : f32 to vector<32x1xf32>
    %171 = arith.addf %167, %170 : vector<32x1xf32>
    %172 = math.rsqrt %171 : vector<32x1xf32>
    %173 = vector.broadcast %172 : vector<32x1xf32> to vector<32x96xf32>
    %174 = arith.mulf %169, %173 : vector<32x96xf32>
    %175 = vector.broadcast %155 : vector<1x96xf32> to vector<32x96xf32>
    %176 = arith.mulf %174, %175 : vector<32x96xf32>
    %177 = vector.broadcast %156 : vector<1x96xf32> to vector<32x96xf32>
    %178 = arith.addf %176, %177 : vector<32x96xf32>
    %179 = arith.addf %103, %178 : vector<32x96xf32>
    %180 = vector.shape_cast %179 : vector<32x96xf32> to vector<2x16x96xf32>
    %cst_66 = arith.constant dense<0.000000e+00> : vector<2x96xf32>
    %181 = vector.multi_reduction <add>, %180, %cst_66 [1] : vector<2x16x96xf32> to vector<2x96xf32>
    %cst_67 = arith.constant 1.600000e+01 : f32
    %182 = vector.broadcast %cst_67 : f32 to vector<2x96xf32>
    %183 = arith.divf %181, %182 : vector<2x96xf32>
    %c0_68 = arith.constant 0 : index
    %c0_69 = arith.constant 0 : index
    %184 = vector.load %arg6[%c0_68, %c0_69] : memref<96x4xf32, #tpu.memory_space<vmem>>, vector<96x4xf32>
    %cst_70 = arith.constant dense<0.000000e+00> : vector<2x4xf32>
    %185 = tpu.matmul %183, %184, %cst_70 {dimension_numbers = #tpu.dot_dimension_numbers<[1], [0], [0], [1], [0, 0, 1, 1], [], []>} : vector<2x96xf32>, vector<96x4xf32>, vector<2x4xf32> -> vector<2x4xf32>
    %c9 = arith.constant 9 : index
    %c0_71 = arith.constant 0 : index
    %186 = vector.load %arg7[%c9, %c0_71] : memref<10x384xf32, #tpu.memory_space<vmem>>, vector<1x4xf32>
    %187 = vector.broadcast %186 : vector<1x4xf32> to vector<2x4xf32>
    %188 = arith.addf %185, %187 : vector<2x4xf32>
    %c0_72 = arith.constant 0 : index
    %c0_73 = arith.constant 0 : index
    %189 = vector.load %arg8[%c0_72, %c0_73] : memref<2x4xf32, #tpu.memory_space<vmem>>, vector<2x4xf32>
    tpu.vector_store %arg8[%c0_72, %c0_73], %188 {strides = array<i32>} : memref<2x4xf32, #tpu.memory_space<vmem>>, vector<2x4xf32>,
    return
  }
}

</mosaic_0001>

<llo_original>
// kernel: tpu_custom_call.1
$region0: #{tpu_custom_call.1}
  #allocation0 [shape = 'u32[]', space=smem, size = 0x4, offset = 0x4, fixed_abs, tag = 'smem constant byte address 0x4 - core index']
  #allocation1 [shape = 'u32[72,128]{1,0:T(1,128)}', space=vmem, size = 0x9000, scoped, tag = 'internal scratch']
  %s0 = inlined_call_operand.hbm [shape: f32[32,48], index: 0, kind: input, shape index: {}]
  %s1 = inlined_call_operand.vmem [shape: f32[48,96], index: 1, kind: input, shape index: {}]
  %s2 = inlined_call_operand.vmem [shape: f32[96,288], index: 2, kind: input, shape index: {}]
  %s3 = inlined_call_operand.vmem [shape: f32[96,96], index: 3, kind: input, shape index: {}]
  %s4 = inlined_call_operand.vmem [shape: f32[96,384], index: 4, kind: input, shape index: {}]
  %s5 = inlined_call_operand.vmem [shape: f32[384,96], index: 5, kind: input, shape index: {}]
  %s6 = inlined_call_operand.vmem [shape: f32[96,4], index: 6, kind: input, shape index: {}]
  %s7 = inlined_call_operand.vmem [shape: f32[10,384], index: 7, kind: input, shape index: {}]
  %s8 = inlined_call_operand.hbm [shape: f32[2,4], index: 8, kind: output, shape index: {}]
  %s9 = sld [smem:[#allocation0]]
  $region46: #{tpu_custom_call.1} parent=0
    _
  %s11 = ssub.s32 1, %s9
  %s12 = scalar_select 0, %s11, %s9
  $region1: #{tpu_custom_call.1} parent=0
    #allocation2 [shape = 'u8[16384]{0}', space=vmem, size = 0x4000, scoped, tag = 'input window, operand 0, single buffered']
    #allocation3 [shape = 's32[1]{0}', space=sflag, size = 0x4, scoped, tag = 'scoped memory for tpu_custom_call.1']
    #allocation4 [shape = 's32[1]{0}', space=sflag, size = 0x4, scoped, tag = 'scoped memory for tpu_custom_call.1']
    #allocation5 [shape = 'u8[1024]{0}', space=vmem, size = 0x400, scoped, tag = 'output window, operand 0, single buffered']
    %13 = vsyncpa [#allocation3], 0
    %14 = vsyncpa [#allocation4], 0
    // Predicated region
    $region2: #{tpu_custom_call.1} parent=1 // pred_check
      _
    $region3: #{tpu_custom_call.1} parent=1 // pred_check_branch
      %16 = sbr.rel (0) target = $region5
    $region4: #{tpu_custom_call.1} parent=1 // pred_region
      %18 = vsyncadd [#allocation3], 0
      %s19 = sshll.u32 %s0, 4
      %s20 = int_to_ptr.hbm [resolvable:$true] %s19
      %s21 = sshll.u32 [#allocation2], 4
      %s22 = int_to_ptr.vmem [resolvable:$true] %s21
      %27 = dma.hbm_to_vmem [thread:$0]  %s20, 512, %s22, [#allocation3], 128, 128, 8
    $region5: #{tpu_custom_call.1} parent=1 // pred_fallthru
      _
    // Predicated region
    $region6: #{tpu_custom_call.1} parent=1 // pred_check
      _
    $region7: #{tpu_custom_call.1} parent=1 // pred_check_branch
      %29 = sbr.rel (0) target = $region9
    $region8: #{tpu_custom_call.1} parent=1 // pred_region
      _
    $region9: #{tpu_custom_call.1} parent=1 // pred_fallthru
      _
    // Predicated region
    $region10: #{tpu_custom_call.1} parent=1 // pred_check
      _
    $region11: #{tpu_custom_call.1} parent=1 // pred_check_branch
      %31 = sbr.rel (0) target = $region13
    $region12: #{tpu_custom_call.1} parent=1 // pred_region
      _
    $region13: #{tpu_custom_call.1} parent=1 // pred_fallthru
      _
    // Predicated region
    $region14: #{tpu_custom_call.1} parent=1 // pred_check
      _
    $region15: #{tpu_custom_call.1} parent=1 // pred_check_branch
      %33 = sbr.rel (0) target = $region17
    $region16: #{tpu_custom_call.1} parent=1 // pred_region
      _
    $region17: #{tpu_custom_call.1} parent=1 // pred_fallthru
      _
    // Predicated region
    $region18: #{tpu_custom_call.1} parent=1 // pred_check
      _
    $region19: #{tpu_custom_call.1} parent=1 // pred_check_branch
      %35 = sbr.rel (0) target = $region21
    $region20: #{tpu_custom_call.1} parent=1 // pred_region
      _
    $region21: #{tpu_custom_call.1} parent=1 // pred_fallthru
      _
    // Predicated region
    $region22: #{tpu_custom_call.1} parent=1 // pred_check
      _
    $region23: #{tpu_custom_call.1} parent=1 // pred_check_branch
      %37 = sbr.rel (0) target = $region25
    $region24: #{tpu_custom_call.1} parent=1 // pred_region
      _
    $region25: #{tpu_custom_call.1} parent=1 // pred_fallthru
      _
    // Predicated region
    $region26: #{tpu_custom_call.1} parent=1 // pred_check
      _
    $region27: #{tpu_custom_call.1} parent=1 // pred_check_branch
      %39 = sbr.rel (0) target = $region29
    $region28: #{tpu_custom_call.1} parent=1 // pred_region
      _
    $region29: #{tpu_custom_call.1} parent=1 // pred_fallthru
      _
    // Predicated region
    $region30: #{tpu_custom_call.1} parent=1 // pred_check
      _
    $region31: #{tpu_custom_call.1} parent=1 // pred_check_branch
      %41 = sbr.rel (0) target = $region33
    $region32: #{tpu_custom_call.1} parent=1 // pred_region
      _
    $region33: #{tpu_custom_call.1} parent=1 // pred_fallthru
      _
    // Predicated region
    $region34: #{tpu_custom_call.1} parent=1 // pred_check
      _
    $region35: #{tpu_custom_call.1} parent=1 // pred_check_branch
      %43 = sbr.rel (0) target = $region37
    $region36: #{tpu_custom_call.1} parent=1 // pred_region
      %45 = dma.done [#allocation3], 512
    $region37: #{tpu_custom_call.1} parent=1 // pred_fallthru
      _
    %v46 = vld [vmem:[#allocation2] sm:$0xff]
    %v47 = vld [vmem:[#allocation2 + $0x8] sm:$0xff]
    %v48 = vld [vmem:[#allocation2 + $0x10] sm:$0xff]
    %v49 = vld [vmem:[#allocation2 + $0x18] sm:$0xff]
    %v50 = vld [vmem:[%s1] sm:$0xff]
    %v51 = vld [vmem:[%s1 + $0x8] sm:$0xff]
    %v52 = vld [vmem:[%s1 + $0x10] sm:$0xff]
    %v53 = vld [vmem:[%s1 + $0x18] sm:$0xff]
    %v54 = vld [vmem:[%s1 + $0x20] sm:$0xff]
    %v55 = vld [vmem:[%s1 + $0x28] sm:$0xff]
    %v56 = vld [vmem:[%s7] ss:$0 sm:$0xff]
    %vm57 = vcmask 392192
    %v59 = vsel %vm57, %v46, 0
    %v62 = vsel %vm57, %v47, 0
    %v65 = vsel %vm57, %v48, 0
    %v68 = vsel %vm57, %v49, 0
    %70 = vmatpush.msra.mxu0 0.0
    %71 = vmatpush.msra.mxu0 0.0
    %72 = vmatpush.msra.mxu0 0.0
    %73 = vmatpush.msra.mxu0 0.0
    %74 = vmatpush.msra.mxu0 0.0
    %75 = vmatpush.msra.mxu0 0.0
    %76 = vmatpush.msra.mxu0 0.0
    %77 = vmatpush.msra.mxu0 0.0
    %78 = vmatpush.msra.mxu0 0.0
    %79 = vmatpush.msra.mxu0 0.0
    %80 = vmatpush.msra.mxu0 %v55
    %81 = vmatpush.msra.mxu0 %v54
    %82 = vmatpush.msra.mxu0 %v53
    %83 = vmatpush.msra.mxu0 %v52
    %84 = vmatpush.msra.mxu0 %v51
    %85 = vmatpush.msra.mxu0 %v50
    %86 = vmatmul.f32.gmra.mxu0 %v59
    %v87 = vpop.f32.mrf.mxu0
    %v88 = vadd.f32 %v56, %v87
    %89 = vmatmul.f32.gmra.mxu0 %v62
    %v90 = vpop.f32.mrf.mxu0
    %v91 = vadd.f32 %v56, %v90
    %92 = vmatmul.f32.gmra.mxu0 %v65
    %v93 = vpop.f32.mrf.mxu0
    %v94 = vadd.f32 %v56, %v93
    %95 = vmatmul.f32.gmra.mxu0 %v68
    %v96 = vpop.f32.mrf.mxu0
    %v97 = vadd.f32 %v56, %v96
    %98 = vdwg.mxu0
    %v99 = vld [vmem:[%s7 + $0x1] ss:$0 sm:$0xff]
    %v100 = vld [vmem:[%s7 + $0x2] ss:$0 sm:$0xff]
    %vm101 = vcmask 785408
    %v102 = vsel %vm101, %v88, 0.0
    %103 = vadd.xlane.f32.xlu0 %v102
    %v104 = vpop.xlane.xlu0 %103
    %v105 = vsel %vm101, %v91, 0.0
    %106 = vadd.xlane.f32.xlu0 %v105
    %v107 = vpop.xlane.xlu0 %106
    %v108 = vsel %vm101, %v94, 0.0
    %109 = vadd.xlane.f32.xlu0 %v108
    %v110 = vpop.xlane.xlu0 %109
    %v111 = vsel %vm101, %v97, 0.0
    %112 = vadd.xlane.f32.xlu0 %v111
    %v113 = vpop.xlane.xlu0 %112
    %v114 = vrcp.pop 96.0
    %v115 = vmul.f32 96.0, %v114
    %v116 = vsub.f32 1.0, %v115
    %v117 = vmul.f32 %v114, %v116
    %v118 = vadd.f32 %v114, %v117
    %vm119 = vweird.f32 %v114
    %v120 = vsel %vm119, %v114, %v118
    %v121 = vmul.f32 %v104, %v120
    %v122 = vmul.f32 %v107, %v120
    %v123 = vmul.f32 %v110, %v120
    %v124 = vmul.f32 %v113, %v120
    %v125 = vsub.f32 %v88, %v121
    %v126 = vsub.f32 %v91, %v122
    %v127 = vsub.f32 %v94, %v123
    %v128 = vsub.f32 %v97, %v124
    %v129 = vmul.f32 %v125, %v125
    %v130 = vmul.f32 %v126, %v126
    %v131 = vmul.f32 %v127, %v127
    %v132 = vmul.f32 %v128, %v128
    %v133 = vsel %vm101, %v129, 0.0
    %134 = vadd.xlane.f32.xlu0 %v133
    %v135 = vpop.xlane.xlu0 %134
    %v136 = vsel %vm101, %v130, 0.0
    %137 = vadd.xlane.f32.xlu0 %v136
    %v138 = vpop.xlane.xlu0 %137
    %v139 = vsel %vm101, %v131, 0.0
    %140 = vadd.xlane.f32.xlu0 %v139
    %v141 = vpop.xlane.xlu0 %140
    %v142 = vsel %vm101, %v132, 0.0
    %143 = vadd.xlane.f32.xlu0 %v142
    %v144 = vpop.xlane.xlu0 %143
    %v145 = vmul.f32 %v135, %v120
    %v146 = vmul.f32 %v138, %v120
    %v147 = vmul.f32 %v141, %v120
    %v148 = vmul.f32 %v144, %v120
    %v149 = vadd.f32 %v145, 1e-05
    %v150 = vadd.f32 %v146, 1e-05
    %v151 = vadd.f32 %v147, 1e-05
    %v152 = vadd.f32 %v148, 1e-05
    %v153 = vrsqrt.pop %v149
    %v154 = vmul.f32 %v153, %v149
    %v155 = vmul.f32 %v154, %v153
    %v156 = vmul.f32 0.5, %v155
    %v157 = vsub.f32 1.5, %v156
    %v158 = vmul.f32 %v153, %v157
    %vm159 = vweird.f32 %v149
    %vm160 = vweird.f32 %v153
    %vm161 = vmor %vm159, %vm160
    %v162 = vsel %vm161, %v153, %v158
    %v163 = vrsqrt.pop %v150
    %v164 = vmul.f32 %v163, %v150
    %v165 = vmul.f32 %v164, %v163
    %v166 = vmul.f32 0.5, %v165
    %v167 = vsub.f32 1.5, %v166
    %v168 = vmul.f32 %v163, %v167
    %vm169 = vweird.f32 %v150
    %vm170 = vweird.f32 %v163
    %vm171 = vmor %vm169, %vm170
    %v172 = vsel %vm171, %v163, %v168
    %v173 = vrsqrt.pop %v151
    %v174 = vmul.f32 %v173, %v151
    %v175 = vmul.f32 %v174, %v173
    %v176 = vmul.f32 0.5, %v175
    %v177 = vsub.f32 1.5, %v176
    %v178 = vmul.f32 %v173, %v177
    %vm179 = vweird.f32 %v151
    %vm180 = vweird.f32 %v173
    %vm181 = vmor %vm179, %vm180
    %v182 = vsel %vm181, %v173, %v178
    %v183 = vrsqrt.pop %v152
    %v184 = vmul.f32 %v183, %v152
    %v185 = vmul.f32 %v184, %v183
    %v186 = vmul.f32 0.5, %v185
    %v187 = vsub.f32 1.5, %v186
    %v188 = vmul.f32 %v183, %v187
    %vm189 = vweird.f32 %v152
    %vm190 = vweird.f32 %v183
    %vm191 = vmor %vm189, %vm190
    %v192 = vsel %vm191, %v183, %v188
    %v193 = vmul.f32 %v125, %v162
    %v194 = vmul.f32 %v126, %v172
    %v195 = vmul.f32 %v127, %v182
    %v196 = vmul.f32 %v128, %v192
    %v197 = vmul.f32 %v193, %v99
    %v198 = vmul.f32 %v194, %v99
    %v199 = vmul.f32 %v195, %v99
    %v200 = vmul.f32 %v196, %v99
    %v201 = vadd.f32 %v197, %v100
    %v202 = vadd.f32 %v198, %v100
    %v203 = vadd.f32 %v199, %v100
    %v204 = vadd.f32 %v200, %v100
    %v205 = vld [vmem:[%s2] sm:$0xff]
    %v206 = vld [vmem:[%s2 + $0x8] sm:$0xff]
    %v207 = vld [vmem:[%s2 + $0x10] sm:$0xff]
    %v208 = vld [vmem:[%s2 + $0x18] sm:$0xff]
    %v209 = vld [vmem:[%s2 + $0x20] sm:$0xff]
    %v210 = vld [vmem:[%s2 + $0x28] sm:$0xff]
    %v211 = vld [vmem:[%s2 + $0x30] sm:$0xff]
    %v212 = vld [vmem:[%s2 + $0x38] sm:$0xff]
    %v213 = vld [vmem:[%s2 + $0x40] sm:$0xff]
    %v214 = vld [vmem:[%s2 + $0x48] sm:$0xff]
    %v215 = vld [vmem:[%s2 + $0x50] sm:$0xff]
    %v216 = vld [vmem:[%s2 + $0x58] sm:$0xff]
    %v217 = vld [vmem:[%s2 + $0x60] sm:$0xff]
    %v218 = vld [vmem:[%s2 + $0x68] sm:$0xff]
    %v219 = vld [vmem:[%s2 + $0x70] sm:$0xff]
    %v220 = vld [vmem:[%s2 + $0x78] sm:$0xff]
    %v221 = vld [vmem:[%s2 + $0x80] sm:$0xff]
    %v222 = vld [vmem:[%s2 + $0x88] sm:$0xff]
    %v223 = vld [vmem:[%s2 + $0x90] sm:$0xff]
    %v224 = vld [vmem:[%s2 + $0x98] sm:$0xff]
    %v225 = vld [vmem:[%s2 + $0xa0] sm:$0xff]
    %v226 = vld [vmem:[%s2 + $0xa8] sm:$0xff]
    %v227 = vld [vmem:[%s2 + $0xb0] sm:$0xff]
    %v228 = vld [vmem:[%s2 + $0xb8] sm:$0xff]
    %v229 = vld [vmem:[%s2 + $0xc0] sm:$0xff]
    %v230 = vld [vmem:[%s2 + $0xc8] sm:$0xff]
    %v231 = vld [vmem:[%s2 + $0xd0] sm:$0xff]
    %v232 = vld [vmem:[%s2 + $0xd8] sm:$0xff]
    %v233 = vld [vmem:[%s2 + $0xe0] sm:$0xff]
    %v234 = vld [vmem:[%s2 + $0xe8] sm:$0xff]
    %v235 = vld [vmem:[%s2 + $0xf0] sm:$0xff]
    %v236 = vld [vmem:[%s2 + $0xf8] sm:$0xff]
    %v237 = vld [vmem:[%s2 + $0x100] sm:$0xff]
    %v238 = vld [vmem:[%s2 + $0x108] sm:$0xff]
    %v239 = vld [vmem:[%s2 + $0x110] sm:$0xff]
    %v240 = vld [vmem:[%s2 + $0x118] sm:$0xff]
    %s241 = scalar_lea.vmem %s7, 3
    %v242 = vld [vmem:[%s241] ss:$8 sm:$0x7]
    %v244 = vperm.slane %v242, 0
    %v245 = vperm.slane %v242, 1
    %v246 = vperm.slane %v242, 2
    %v251 = vsel %vm101, %v201, 0
    %v254 = vsel %vm101, %v202, 0
    %v257 = vsel %vm101, %v203, 0
    %v260 = vsel %vm101, %v204, 0
    %262 = vmatpush.msra.mxu0 0.0
    %263 = vmatpush.msra.mxu0 0.0
    %264 = vmatpush.msra.mxu0 0.0
    %265 = vmatpush.msra.mxu0 0.0
    %266 = vmatpush.msra.mxu0 %v238
    %267 = vmatpush.msra.mxu0 %v235
    %268 = vmatpush.msra.mxu0 %v232
    %269 = vmatpush.msra.mxu0 %v229
    %270 = vmatpush.msra.mxu0 %v226
    %271 = vmatpush.msra.mxu0 %v223
    %272 = vmatpush.msra.mxu0 %v220
    %273 = vmatpush.msra.mxu0 %v217
    %274 = vmatpush.msra.mxu0 %v214
    %275 = vmatpush.msra.mxu0 %v211
    %276 = vmatpush.msra.mxu0 %v208
    %277 = vmatpush.msra.mxu0 %v205
    %278 = vmatmul.f32.gmra.mxu0 %v251
    %v279 = vpop.f32.mrf.mxu0
    %v280 = vadd.f32 %v244, %v279
    %281 = vmatmul.f32.gmra.mxu0 %v254
    %v282 = vpop.f32.mrf.mxu0
    %v283 = vadd.f32 %v244, %v282
    %284 = vmatmul.f32.gmra.mxu0 %v257
    %v285 = vpop.f32.mrf.mxu0
    %v286 = vadd.f32 %v244, %v285
    %287 = vmatmul.f32.gmra.mxu0 %v260
    %v288 = vpop.f32.mrf.mxu0
    %v289 = vadd.f32 %v244, %v288
    %290 = vdwg.mxu0
    %291 = vmatpush.msra.mxu0 0.0
    %292 = vmatpush.msra.mxu0 0.0
    %293 = vmatpush.msra.mxu0 0.0
    %294 = vmatpush.msra.mxu0 0.0
    %295 = vmatpush.msra.mxu0 %v239
    %296 = vmatpush.msra.mxu0 %v236
    %297 = vmatpush.msra.mxu0 %v233
    %298 = vmatpush.msra.mxu0 %v230
    %299 = vmatpush.msra.mxu0 %v227
    %300 = vmatpush.msra.mxu0 %v224
    %301 = vmatpush.msra.mxu0 %v221
    %302 = vmatpush.msra.mxu0 %v218
    %303 = vmatpush.msra.mxu0 %v215
    %304 = vmatpush.msra.mxu0 %v212
    %305 = vmatpush.msra.mxu0 %v209
    %306 = vmatpush.msra.mxu0 %v206
    %307 = vmatmul.f32.gmra.mxu0 %v251
    %v308 = vpop.f32.mrf.mxu0
    %v309 = vadd.f32 %v245, %v308
    %310 = vmatmul.f32.gmra.mxu0 %v254
    %v311 = vpop.f32.mrf.mxu0
    %v312 = vadd.f32 %v245, %v311
    %313 = vmatmul.f32.gmra.mxu0 %v257
    %v314 = vpop.f32.mrf.mxu0
    %v315 = vadd.f32 %v245, %v314
    %316 = vmatmul.f32.gmra.mxu0 %v260
    %v317 = vpop.f32.mrf.mxu0
    %v318 = vadd.f32 %v245, %v317
    %319 = vdwg.mxu0
    %320 = vmatpush.msra.mxu0 0.0
    %321 = vmatpush.msra.mxu0 0.0
    %322 = vmatpush.msra.mxu0 0.0
    %323 = vmatpush.msra.mxu0 0.0
    %324 = vmatpush.msra.mxu0 %v240
    %325 = vmatpush.msra.mxu0 %v237
    %326 = vmatpush.msra.mxu0 %v234
    %327 = vmatpush.msra.mxu0 %v231
    %328 = vmatpush.msra.mxu0 %v228
    %329 = vmatpush.msra.mxu0 %v225
    %330 = vmatpush.msra.mxu0 %v222
    %331 = vmatpush.msra.mxu0 %v219
    %332 = vmatpush.msra.mxu0 %v216
    %333 = vmatpush.msra.mxu0 %v213
    %334 = vmatpush.msra.mxu0 %v210
    %335 = vmatpush.msra.mxu0 %v207
    %336 = vmatmul.f32.gmra.mxu0 %v251
    %v337 = vpop.f32.mrf.mxu0
    %v338 = vadd.f32 %v246, %v337
    %339 = vmatmul.f32.gmra.mxu0 %v254
    %v340 = vpop.f32.mrf.mxu0
    %v341 = vadd.f32 %v246, %v340
    %342 = vmatmul.f32.gmra.mxu0 %v257
    %v343 = vpop.f32.mrf.mxu0
    %v344 = vadd.f32 %v246, %v343
    %345 = vmatmul.f32.gmra.mxu0 %v260
    %v346 = vpop.f32.mrf.mxu0
    %v347 = vadd.f32 %v246, %v346
    %348 = vdwg.mxu0
    %v349 = vmul.f32 %v280, 0.17677669
    %v350 = vmul.f32 %v283, 0.17677669
    %v351 = vmul.f32 %v286, 0.17677669
    %v352 = vmul.f32 %v289, 0.17677669
    %355 = vrot.lane.b32.xlu0 %v280, 32
    %v356 = vpop.permute.xlu0 %355
    %357 = vrot.lane.b32.xlu0 %v283, 32
    %v358 = vpop.permute.xlu0 %357
    %vm359 = vcmask 261120
    %v361 = vsel %vm359, %v349, 0
    %v364 = vsel %vm359, %v350, 0
    %v366 = vsel %vm359, %v356, 0
    %v368 = vsel %vm359, %v358, 0
    %370 = vmatpush.xpose.msra.mxu0 0.0
    %371 = vmatpush.xpose.msra.mxu0 0.0
    %372 = vmatpush.xpose.msra.mxu0 0.0
    %373 = vmatpush.xpose.msra.mxu0 0.0
    %374 = vmatpush.xpose.msra.mxu0 0.0
    %375 = vmatpush.xpose.msra.mxu0 0.0
    %376 = vmatpush.xpose.msra.mxu0 0.0
    %377 = vmatpush.xpose.msra.mxu0 0.0
    %378 = vmatpush.xpose.msra.mxu0 0.0
    %379 = vmatpush.xpose.msra.mxu0 0.0
    %380 = vmatpush.xpose.msra.mxu0 0.0
    %381 = vmatpush.xpose.msra.mxu0 0.0
    %382 = vmatpush.xpose.msra.mxu0 0.0
    %383 = vmatpush.xpose.msra.mxu0 0.0
    %384 = vmatpush.xpose.msra.mxu0 %v368
    %385 = vmatpush.xpose.msra.mxu0 %v366
    %386 = vmatmul.f32.gmra.mxu0 %v361
    %v387 = vpop.f32.mrf.mxu0
    %v388 = vadd.f32 0.0, %v387
    %389 = vmatmul.f32.gmra.mxu0 %v364
    %v390 = vpop.f32.mrf.mxu0
    %v391 = vadd.f32 0.0, %v390
    %392 = vdwg.mxu0
    %395 = vrot.lane.b32.xlu0 %v286, 32
    %v396 = vpop.permute.xlu0 %395
    %397 = vrot.lane.b32.xlu0 %v289, 32
    %v398 = vpop.permute.xlu0 %397
    %v400 = vsel %vm359, %v351, 0
    %v403 = vsel %vm359, %v352, 0
    %v405 = vsel %vm359, %v396, 0
    %v407 = vsel %vm359, %v398, 0
    %409 = vmatpush.xpose.msra.mxu0 0.0
    %410 = vmatpush.xpose.msra.mxu0 0.0
    %411 = vmatpush.xpose.msra.mxu0 0.0
    %412 = vmatpush.xpose.msra.mxu0 0.0
    %413 = vmatpush.xpose.msra.mxu0 0.0
    %414 = vmatpush.xpose.msra.mxu0 0.0
    %415 = vmatpush.xpose.msra.mxu0 0.0
    %416 = vmatpush.xpose.msra.mxu0 0.0
    %417 = vmatpush.xpose.msra.mxu0 0.0
    %418 = vmatpush.xpose.msra.mxu0 0.0
    %419 = vmatpush.xpose.msra.mxu0 0.0
    %420 = vmatpush.xpose.msra.mxu0 0.0
    %421 = vmatpush.xpose.msra.mxu0 0.0
    %422 = vmatpush.xpose.msra.mxu0 0.0
    %423 = vmatpush.xpose.msra.mxu0 %v407
    %424 = vmatpush.xpose.msra.mxu0 %v405
    %425 = vmatmul.f32.gmra.mxu0 %v400
    %v426 = vpop.f32.mrf.mxu0
    %v427 = vadd.f32 0.0, %v426
    %428 = vmatmul.f32.gmra.mxu0 %v403
    %v429 = vpop.f32.mrf.mxu0
    %v430 = vadd.f32 0.0, %v429
    %431 = vdwg.mxu0
    %vm432 = vcmask 130048
    %v433 = vsel %vm432, %v388, -inf
    %434 = vmax.xlane.f32.xlu0 %v433
    %v435 = vpop.xlane.xlu0 %434
    %v436 = vsel %vm432, %v391, -inf
    %437 = vmax.xlane.f32.xlu0 %v436
    %v438 = vpop.xlane.xlu0 %437
    %v439 = vsel %vm432, %v427, -inf
    %440 = vmax.xlane.f32.xlu0 %v439
    %v441 = vpop.xlane.xlu0 %440
    %v442 = vsel %vm432, %v430, -inf
    %443 = vmax.xlane.f32.xlu0 %v442
    %v444 = vpop.xlane.xlu0 %443
    %v445 = vsub.f32 %v388, %v435
    %v446 = vsub.f32 %v391, %v438
    %v447 = vsub.f32 %v427, %v441
    %v448 = vsub.f32 %v430, %v444
    %v449 = vmul.f32 %v445, 1.442695
    %v450 = vpow.pop %v449
    %v451 = vmul.f32 %v446, 1.442695
    %v452 = vpow.pop %v451
    %v453 = vmul.f32 %v447, 1.442695
    %v454 = vpow.pop %v453
    %v455 = vmul.f32 %v448, 1.442695
    %v456 = vpow.pop %v455
    %v457 = vsel %vm432, %v450, 0.0
    %458 = vadd.xlane.f32.xlu0 %v457
    %v459 = vpop.xlane.xlu0 %458
    %v460 = vsel %vm432, %v452, 0.0
    %461 = vadd.xlane.f32.xlu0 %v460
    %v462 = vpop.xlane.xlu0 %461
    %v463 = vsel %vm432, %v454, 0.0
    %464 = vadd.xlane.f32.xlu0 %v463
    %v465 = vpop.xlane.xlu0 %464
    %v466 = vsel %vm432, %v456, 0.0
    %467 = vadd.xlane.f32.xlu0 %v466
    %v468 = vpop.xlane.xlu0 %467
    %v469 = vrcp.pop %v459
    %v470 = vrcp.pop %v462
    %v471 = vrcp.pop %v465
    %v472 = vrcp.pop %v468
    %v473 = vmul.f32 %v450, %v469
    %v474 = vmul.f32 %v452, %v470
    %v475 = vmul.f32 %v454, %v471
    %v476 = vmul.f32 %v456, %v472
    %479 = vrot.lane.b32.xlu0 %v309, 64
    %v480 = vpop.permute.xlu0 %479
    %481 = vrot.lane.b32.xlu0 %v312, 64
    %v482 = vpop.permute.xlu0 %481
    %v486 = vsel %vm432, %v473, 0
    %v489 = vsel %vm432, %v474, 0
    %491 = vmatpush.msra.mxu0 0.0
    %492 = vmatpush.msra.mxu0 0.0
    %493 = vmatpush.msra.mxu0 0.0
    %494 = vmatpush.msra.mxu0 0.0
    %495 = vmatpush.msra.mxu0 0.0
    %496 = vmatpush.msra.mxu0 0.0
    %497 = vmatpush.msra.mxu0 0.0
    %498 = vmatpush.msra.mxu0 0.0
    %499 = vmatpush.msra.mxu0 0.0
    %500 = vmatpush.msra.mxu0 0.0
    %501 = vmatpush.msra.mxu0 0.0
    %502 = vmatpush.msra.mxu0 0.0
    %503 = vmatpush.msra.mxu0 0.0
    %504 = vmatpush.msra.mxu0 0.0
    %505 = vmatpush.msra.mxu0 %v482
    %506 = vmatpush.msra.mxu0 %v480
    %507 = vmatmul.f32.gmra.mxu0 %v486
    %v508 = vpop.f32.mrf.mxu0
    %v509 = vadd.f32 0.0, %v508
    %510 = vmatmul.f32.gmra.mxu0 %v489
    %v511 = vpop.f32.mrf.mxu0
    %v512 = vadd.f32 0.0, %v511
    %513 = vdwg.mxu0
    %516 = vrot.lane.b32.xlu0 %v315, 64
    %v517 = vpop.permute.xlu0 %516
    %518 = vrot.lane.b32.xlu0 %v318, 64
    %v519 = vpop.permute.xlu0 %518
    %v523 = vsel %vm432, %v475, 0
    %v526 = vsel %vm432, %v476, 0
    %528 = vmatpush.msra.mxu0 0.0
    %529 = vmatpush.msra.mxu0 0.0
    %530 = vmatpush.msra.mxu0 0.0
    %531 = vmatpush.msra.mxu0 0.0
    %532 = vmatpush.msra.mxu0 0.0
    %533 = vmatpush.msra.mxu0 0.0
    %534 = vmatpush.msra.mxu0 0.0
    %535 = vmatpush.msra.mxu0 0.0
    %536 = vmatpush.msra.mxu0 0.0
    %537 = vmatpush.msra.mxu0 0.0
    %538 = vmatpush.msra.mxu0 0.0
    %539 = vmatpush.msra.mxu0 0.0
    %540 = vmatpush.msra.mxu0 0.0
    %541 = vmatpush.msra.mxu0 0.0
    %542 = vmatpush.msra.mxu0 %v519
    %543 = vmatpush.msra.mxu0 %v517
    %544 = vmatmul.f32.gmra.mxu0 %v523
    %v545 = vpop.f32.mrf.mxu0
    %v546 = vadd.f32 0.0, %v545
    %547 = vmatmul.f32.gmra.mxu0 %v526
    %v548 = vpop.f32.mrf.mxu0
    %v549 = vadd.f32 0.0, %v548
    %550 = vdwg.mxu0
    %551 = vrot.lane.b32.xlu0 %v349, 96
    %v552 = vpop.permute.xlu0 %551
    %553 = vrot.lane.b32.xlu0 %v350, 96
    %v554 = vpop.permute.xlu0 %553
    %v555 = vsel %vm359, %v552, 0
    %v557 = vsel %vm359, %v554, 0
    %v559 = vsel %vm359, %v309, 0
    %v561 = vsel %vm359, %v312, 0
    %563 = vmatpush.xpose.msra.mxu0 0.0
    %564 = vmatpush.xpose.msra.mxu0 0.0
    %565 = vmatpush.xpose.msra.mxu0 0.0
    %566 = vmatpush.xpose.msra.mxu0 0.0
    %567 = vmatpush.xpose.msra.mxu0 0.0
    %568 = vmatpush.xpose.msra.mxu0 0.0
    %569 = vmatpush.xpose.msra.mxu0 0.0
    %570 = vmatpush.xpose.msra.mxu0 0.0
    %571 = vmatpush.xpose.msra.mxu0 0.0
    %572 = vmatpush.xpose.msra.mxu0 0.0
    %573 = vmatpush.xpose.msra.mxu0 0.0
    %574 = vmatpush.xpose.msra.mxu0 0.0
    %575 = vmatpush.xpose.msra.mxu0 0.0
    %576 = vmatpush.xpose.msra.mxu0 0.0
    %577 = vmatpush.xpose.msra.mxu0 %v561
    %578 = vmatpush.xpose.msra.mxu0 %v559
    %579 = vmatmul.f32.gmra.mxu0 %v555
    %v580 = vpop.f32.mrf.mxu0
    %v581 = vadd.f32 0.0, %v580
    %582 = vmatmul.f32.gmra.mxu0 %v557
    %v583 = vpop.f32.mrf.mxu0
    %v584 = vadd.f32 0.0, %v583
    %585 = vdwg.mxu0
    %586 = vrot.lane.b32.xlu0 %v351, 96
    %v587 = vpop.permute.xlu0 %586
    %588 = vrot.lane.b32.xlu0 %v352, 96
    %v589 = vpop.permute.xlu0 %588
    %v590 = vsel %vm359, %v587, 0
    %v592 = vsel %vm359, %v589, 0
    %v594 = vsel %vm359, %v315, 0
    %v596 = vsel %vm359, %v318, 0
    %598 = vmatpush.xpose.msra.mxu0 0.0
    %599 = vmatpush.xpose.msra.mxu0 0.0
    %600 = vmatpush.xpose.msra.mxu0 0.0
    %601 = vmatpush.xpose.msra.mxu0 0.0
    %602 = vmatpush.xpose.msra.mxu0 0.0
    %603 = vmatpush.xpose.msra.mxu0 0.0
    %604 = vmatpush.xpose.msra.mxu0 0.0
    %605 = vmatpush.xpose.msra.mxu0 0.0
    %606 = vmatpush.xpose.msra.mxu0 0.0
    %607 = vmatpush.xpose.msra.mxu0 0.0
    %608 = vmatpush.xpose.msra.mxu0 0.0
    %609 = vmatpush.xpose.msra.mxu0 0.0
    %610 = vmatpush.xpose.msra.mxu0 0.0
    %611 = vmatpush.xpose.msra.mxu0 0.0
    %612 = vmatpush.xpose.msra.mxu0 %v596
    %613 = vmatpush.xpose.msra.mxu0 %v594
    %614 = vmatmul.f32.gmra.mxu0 %v590
    %v615 = vpop.f32.mrf.mxu0
    %v616 = vadd.f32 0.0, %v615
    %617 = vmatmul.f32.gmra.mxu0 %v592
    %v618 = vpop.f32.mrf.mxu0
    %v619 = vadd.f32 0.0, %v618
    %620 = vdwg.mxu0
    %v621 = vsel %vm432, %v581, -inf
    %622 = vmax.xlane.f32.xlu0 %v621
    %v623 = vpop.xlane.xlu0 %622
    %v624 = vsel %vm432, %v584, -inf
    %625 = vmax.xlane.f32.xlu0 %v624
    %v626 = vpop.xlane.xlu0 %625
    %v627 = vsel %vm432, %v616, -inf
    %628 = vmax.xlane.f32.xlu0 %v627
    %v629 = vpop.xlane.xlu0 %628
    %v630 = vsel %vm432, %v619, -inf
    %631 = vmax.xlane.f32.xlu0 %v630
    %v632 = vpop.xlane.xlu0 %631
    %v633 = vsub.f32 %v581, %v623
    %v634 = vsub.f32 %v584, %v626
    %v635 = vsub.f32 %v616, %v629
    %v636 = vsub.f32 %v619, %v632
    %v637 = vmul.f32 %v633, 1.442695
    %v638 = vpow.pop %v637
    %v639 = vmul.f32 %v634, 1.442695
    %v640 = vpow.pop %v639
    %v641 = vmul.f32 %v635, 1.442695
    %v642 = vpow.pop %v641
    %v643 = vmul.f32 %v636, 1.442695
    %v644 = vpow.pop %v643
    %v645 = vsel %vm432, %v638, 0.0
    %646 = vadd.xlane.f32.xlu0 %v645
    %v647 = vpop.xlane.xlu0 %646
    %v648 = vsel %vm432, %v640, 0.0
    %649 = vadd.xlane.f32.xlu0 %v648
    %v650 = vpop.xlane.xlu0 %649
    %v651 = vsel %vm432, %v642, 0.0
    %652 = vadd.xlane.f32.xlu0 %v651
    %v653 = vpop.xlane.xlu0 %652
    %v654 = vsel %vm432, %v644, 0.0
    %655 = vadd.xlane.f32.xlu0 %v654
    %v656 = vpop.xlane.xlu0 %655
    %v657 = vrcp.pop %v647
    %v658 = vrcp.pop %v650
    %v659 = vrcp.pop %v653
    %v660 = vrcp.pop %v656
    %v661 = vmul.f32 %v638, %v657
    %v662 = vmul.f32 %v640, %v658
    %v663 = vmul.f32 %v642, %v659
    %v664 = vmul.f32 %v644, %v660
    %665 = vrot.lane.b32.xlu0 %v309, 32
    %v666 = vpop.permute.xlu0 %665
    %667 = vrot.lane.b32.xlu0 %v312, 32
    %v668 = vpop.permute.xlu0 %667
    %v672 = vsel %vm432, %v661, 0
    %v675 = vsel %vm432, %v662, 0
    %677 = vmatpush.msra.mxu0 0.0
    %678 = vmatpush.msra.mxu0 0.0
    %679 = vmatpush.msra.mxu0 0.0
    %680 = vmatpush.msra.mxu0 0.0
    %681 = vmatpush.msra.mxu0 0.0
    %682 = vmatpush.msra.mxu0 0.0
    %683 = vmatpush.msra.mxu0 0.0
    %684 = vmatpush.msra.mxu0 0.0
    %685 = vmatpush.msra.mxu0 0.0
    %686 = vmatpush.msra.mxu0 0.0
    %687 = vmatpush.msra.mxu0 0.0
    %688 = vmatpush.msra.mxu0 0.0
    %689 = vmatpush.msra.mxu0 0.0
    %690 = vmatpush.msra.mxu0 0.0
    %691 = vmatpush.msra.mxu0 %v668
    %692 = vmatpush.msra.mxu0 %v666
    %693 = vmatmul.f32.gmra.mxu0 %v672
    %v694 = vpop.f32.mrf.mxu0
    %v695 = vadd.f32 0.0, %v694
    %696 = vmatmul.f32.gmra.mxu0 %v675
    %v697 = vpop.f32.mrf.mxu0
    %v698 = vadd.f32 0.0, %v697
    %699 = vdwg.mxu0
    %700 = vrot.lane.b32.xlu0 %v315, 32
    %v701 = vpop.permute.xlu0 %700
    %702 = vrot.lane.b32.xlu0 %v318, 32
    %v703 = vpop.permute.xlu0 %702
    %v707 = vsel %vm432, %v663, 0
    %v710 = vsel %vm432, %v664, 0
    %712 = vmatpush.msra.mxu0 0.0
    %713 = vmatpush.msra.mxu0 0.0
    %714 = vmatpush.msra.mxu0 0.0
    %715 = vmatpush.msra.mxu0 0.0
    %716 = vmatpush.msra.mxu0 0.0
    %717 = vmatpush.msra.mxu0 0.0
    %718 = vmatpush.msra.mxu0 0.0
    %719 = vmatpush.msra.mxu0 0.0
    %720 = vmatpush.msra.mxu0 0.0
    %721 = vmatpush.msra.mxu0 0.0
    %722 = vmatpush.msra.mxu0 0.0
    %723 = vmatpush.msra.mxu0 0.0
    %724 = vmatpush.msra.mxu0 0.0
    %725 = vmatpush.msra.mxu0 0.0
    %726 = vmatpush.msra.mxu0 %v703
    %727 = vmatpush.msra.mxu0 %v701
    %728 = vmatmul.f32.gmra.mxu0 %v707
    %v729 = vpop.f32.mrf.mxu0
    %v730 = vadd.f32 0.0, %v729
    %731 = vmatmul.f32.gmra.mxu0 %v710
    %v732 = vpop.f32.mrf.mxu0
    %v733 = vadd.f32 0.0, %v732
    %734 = vdwg.mxu0
    %735 = vrot.lane.b32.xlu0 %v349, 64
    %v736 = vpop.permute.xlu0 %735
    %737 = vrot.lane.b32.xlu0 %v350, 64
    %v738 = vpop.permute.xlu0 %737
    %739 = vrot.lane.b32.xlu0 %v309, 96
    %v740 = vpop.permute.xlu0 %739
    %741 = vrot.lane.b32.xlu0 %v312, 96
    %v742 = vpop.permute.xlu0 %741
    %v743 = vsel %vm359, %v736, 0
    %v745 = vsel %vm359, %v738, 0
    %v747 = vsel %vm359, %v740, 0
    %v749 = vsel %vm359, %v742, 0
    %751 = vmatpush.xpose.msra.mxu0 0.0
    %752 = vmatpush.xpose.msra.mxu0 0.0
    %753 = vmatpush.xpose.msra.mxu0 0.0
    %754 = vmatpush.xpose.msra.mxu0 0.0
    %755 = vmatpush.xpose.msra.mxu0 0.0
    %756 = vmatpush.xpose.msra.mxu0 0.0
    %757 = vmatpush.xpose.msra.mxu0 0.0
    %758 = vmatpush.xpose.msra.mxu0 0.0
    %759 = vmatpush.xpose.msra.mxu0 0.0
    %760 = vmatpush.xpose.msra.mxu0 0.0
    %761 = vmatpush.xpose.msra.mxu0 0.0
    %762 = vmatpush.xpose.msra.mxu0 0.0
    %763 = vmatpush.xpose.msra.mxu0 0.0
    %764 = vmatpush.xpose.msra.mxu0 0.0
    %765 = vmatpush.xpose.msra.mxu0 %v749
    %766 = vmatpush.xpose.msra.mxu0 %v747
    %767 = vmatmul.f32.gmra.mxu0 %v743
    %v768 = vpop.f32.mrf.mxu0
    %v769 = vadd.f32 0.0, %v768
    %770 = vmatmul.f32.gmra.mxu0 %v745
    %v771 = vpop.f32.mrf.mxu0
    %v772 = vadd.f32 0.0, %v771
    %773 = vdwg.mxu0
    %774 = vrot.lane.b32.xlu0 %v351, 64
    %v775 = vpop.permute.xlu0 %774
    %776 = vrot.lane.b32.xlu0 %v352, 64
    %v777 = vpop.permute.xlu0 %776
    %778 = vrot.lane.b32.xlu0 %v315, 96
    %v779 = vpop.permute.xlu0 %778
    %780 = vrot.lane.b32.xlu0 %v318, 96
    %v781 = vpop.permute.xlu0 %780
    %v782 = vsel %vm359, %v775, 0
    %v784 = vsel %vm359, %v777, 0
    %v786 = vsel %vm359, %v779, 0
    %v788 = vsel %vm359, %v781, 0
    %790 = vmatpush.xpose.msra.mxu0 0.0
    %791 = vmatpush.xpose.msra.mxu0 0.0
    %792 = vmatpush.xpose.msra.mxu0 0.0
    %793 = vmatpush.xpose.msra.mxu0 0.0
    %794 = vmatpush.xpose.msra.mxu0 0.0
    %795 = vmatpush.xpose.msra.mxu0 0.0
    %796 = vmatpush.xpose.msra.mxu0 0.0
    %797 = vmatpush.xpose.msra.mxu0 0.0
    %798 = vmatpush.xpose.msra.mxu0 0.0
    %799 = vmatpush.xpose.msra.mxu0 0.0
    %800 = vmatpush.xpose.msra.mxu0 0.0
    %801 = vmatpush.xpose.msra.mxu0 0.0
    %802 = vmatpush.xpose.msra.mxu0 0.0
    %803 = vmatpush.xpose.msra.mxu0 0.0
    %804 = vmatpush.xpose.msra.mxu0 %v788
    %805 = vmatpush.xpose.msra.mxu0 %v786
    %806 = vmatmul.f32.gmra.mxu0 %v782
    %v807 = vpop.f32.mrf.mxu0
    %v808 = vadd.f32 0.0, %v807
    %809 = vmatmul.f32.gmra.mxu0 %v784
    %v810 = vpop.f32.mrf.mxu0
    %v811 = vadd.f32 0.0, %v810
    %812 = vdwg.mxu0
    %v813 = vsel %vm432, %v769, -inf
    %814 = vmax.xlane.f32.xlu0 %v813
    %v815 = vpop.xlane.xlu0 %814
    %v816 = vsel %vm432, %v772, -inf
    %817 = vmax.xlane.f32.xlu0 %v816
    %v818 = vpop.xlane.xlu0 %817
    %v819 = vsel %vm432, %v808, -inf
    %820 = vmax.xlane.f32.xlu0 %v819
    %v821 = vpop.xlane.xlu0 %820
    %v822 = vsel %vm432, %v811, -inf
    %823 = vmax.xlane.f32.xlu0 %v822
    %v824 = vpop.xlane.xlu0 %823
    %v825 = vsub.f32 %v769, %v815
    %v826 = vsub.f32 %v772, %v818
    %v827 = vsub.f32 %v808, %v821
    %v828 = vsub.f32 %v811, %v824
    %v829 = vmul.f32 %v825, 1.442695
    %v830 = vpow.pop %v829
    %v831 = vmul.f32 %v826, 1.442695
    %v832 = vpow.pop %v831
    %v833 = vmul.f32 %v827, 1.442695
    %v834 = vpow.pop %v833
    %v835 = vmul.f32 %v828, 1.442695
    %v836 = vpow.pop %v835
    %v837 = vsel %vm432, %v830, 0.0
    %838 = vadd.xlane.f32.xlu0 %v837
    %v839 = vpop.xlane.xlu0 %838
    %v840 = vsel %vm432, %v832, 0.0
    %841 = vadd.xlane.f32.xlu0 %v840
    %v842 = vpop.xlane.xlu0 %841
    %v843 = vsel %vm432, %v834, 0.0
    %844 = vadd.xlane.f32.xlu0 %v843
    %v845 = vpop.xlane.xlu0 %844
    %v846 = vsel %vm432, %v836, 0.0
    %847 = vadd.xlane.f32.xlu0 %v846
    %v848 = vpop.xlane.xlu0 %847
    %v849 = vrcp.pop %v839
    %v850 = vrcp.pop %v842
    %v851 = vrcp.pop %v845
    %v852 = vrcp.pop %v848
    %v853 = vmul.f32 %v830, %v849
    %v854 = vmul.f32 %v832, %v850
    %v855 = vmul.f32 %v834, %v851
    %v856 = vmul.f32 %v836, %v852
    %v858 = vsel %vm432, %v853, 0
    %v861 = vsel %vm432, %v854, 0
    %863 = vmatpush.msra.mxu0 0.0
    %864 = vmatpush.msra.mxu0 0.0
    %865 = vmatpush.msra.mxu0 0.0
    %866 = vmatpush.msra.mxu0 0.0
    %867 = vmatpush.msra.mxu0 0.0
    %868 = vmatpush.msra.mxu0 0.0
    %869 = vmatpush.msra.mxu0 0.0
    %870 = vmatpush.msra.mxu0 0.0
    %871 = vmatpush.msra.mxu0 0.0
    %872 = vmatpush.msra.mxu0 0.0
    %873 = vmatpush.msra.mxu0 0.0
    %874 = vmatpush.msra.mxu0 0.0
    %875 = vmatpush.msra.mxu0 0.0
    %876 = vmatpush.msra.mxu0 0.0
    %877 = vmatpush.msra.mxu0 %v341
    %878 = vmatpush.msra.mxu0 %v338
    %879 = vmatmul.f32.gmra.mxu0 %v858
    %v880 = vpop.f32.mrf.mxu0
    %v881 = vadd.f32 0.0, %v880
    %882 = vmatmul.f32.gmra.mxu0 %v861
    %v883 = vpop.f32.mrf.mxu0
    %v884 = vadd.f32 0.0, %v883
    %885 = vdwg.mxu0
    %v887 = vsel %vm432, %v855, 0
    %v890 = vsel %vm432, %v856, 0
    %892 = vmatpush.msra.mxu0 0.0
    %893 = vmatpush.msra.mxu0 0.0
    %894 = vmatpush.msra.mxu0 0.0
    %895 = vmatpush.msra.mxu0 0.0
    %896 = vmatpush.msra.mxu0 0.0
    %897 = vmatpush.msra.mxu0 0.0
    %898 = vmatpush.msra.mxu0 0.0
    %899 = vmatpush.msra.mxu0 0.0
    %900 = vmatpush.msra.mxu0 0.0
    %901 = vmatpush.msra.mxu0 0.0
    %902 = vmatpush.msra.mxu0 0.0
    %903 = vmatpush.msra.mxu0 0.0
    %904 = vmatpush.msra.mxu0 0.0
    %905 = vmatpush.msra.mxu0 0.0
    %906 = vmatpush.msra.mxu0 %v347
    %907 = vmatpush.msra.mxu0 %v344
    %908 = vmatmul.f32.gmra.mxu0 %v887
    %v909 = vpop.f32.mrf.mxu0
    %v910 = vadd.f32 0.0, %v909
    %911 = vmatmul.f32.gmra.mxu0 %v890
    %v912 = vpop.f32.mrf.mxu0
    %v913 = vadd.f32 0.0, %v912
    %914 = vdwg.mxu0
    %919 = vrot.lane.b32.xlu0 %v695, 32
    %v920 = vpop.permute.xlu0 %919
    %921 = vrot.lane.b32.xlu0 %v698, 32
    %v922 = vpop.permute.xlu0 %921
    %923 = vrot.lane.b32.xlu0 %v730, 32
    %v924 = vpop.permute.xlu0 %923
    %925 = vrot.lane.b32.xlu0 %v733, 32
    %v926 = vpop.permute.xlu0 %925
    %935 = vrot.lane.b32.xlu0 %v881, 64
    %v936 = vpop.permute.xlu0 %935
    %937 = vrot.lane.b32.xlu0 %v884, 64
    %v938 = vpop.permute.xlu0 %937
    %939 = vrot.lane.b32.xlu0 %v910, 64
    %v940 = vpop.permute.xlu0 %939
    %941 = vrot.lane.b32.xlu0 %v913, 64
    %v942 = vpop.permute.xlu0 %941
    %v947 = vsel %vm359, %v509, %v920
    %v948 = vsel %vm359, %v512, %v922
    %v949 = vsel %vm359, %v546, %v924
    %v950 = vsel %vm359, %v549, %v926
    %vm951 = vcmask 523264
    %v952 = vsel %vm951, %v947, %v936
    %v953 = vsel %vm951, %v948, %v938
    %v954 = vsel %vm951, %v949, %v940
    %v955 = vsel %vm951, %v950, %v942
    %v956 = vld [vmem:[%s3] sm:$0xff]
    %v957 = vld [vmem:[%s3 + $0x8] sm:$0xff]
    %v958 = vld [vmem:[%s3 + $0x10] sm:$0xff]
    %v959 = vld [vmem:[%s3 + $0x18] sm:$0xff]
    %v960 = vld [vmem:[%s3 + $0x20] sm:$0xff]
    %v961 = vld [vmem:[%s3 + $0x28] sm:$0xff]
    %v962 = vld [vmem:[%s3 + $0x30] sm:$0xff]
    %v963 = vld [vmem:[%s3 + $0x38] sm:$0xff]
    %v964 = vld [vmem:[%s3 + $0x40] sm:$0xff]
    %v965 = vld [vmem:[%s3 + $0x48] sm:$0xff]
    %v966 = vld [vmem:[%s3 + $0x50] sm:$0xff]
    %v967 = vld [vmem:[%s3 + $0x58] sm:$0xff]
    %v968 = vld [vmem:[%s7 + $0x4] ss:$0 sm:$0xff]
    %v970 = vsel %vm101, %v952, 0
    %v973 = vsel %vm101, %v953, 0
    %v976 = vsel %vm101, %v954, 0
    %v979 = vsel %vm101, %v955, 0
    %981 = vmatpush.msra.mxu0 0.0
    %982 = vmatpush.msra.mxu0 0.0
    %983 = vmatpush.msra.mxu0 0.0
    %984 = vmatpush.msra.mxu0 0.0
    %985 = vmatpush.msra.mxu0 %v967
    %986 = vmatpush.msra.mxu0 %v966
    %987 = vmatpush.msra.mxu0 %v965
    %988 = vmatpush.msra.mxu0 %v964
    %989 = vmatpush.msra.mxu0 %v963
    %990 = vmatpush.msra.mxu0 %v962
    %991 = vmatpush.msra.mxu0 %v961
    %992 = vmatpush.msra.mxu0 %v960
    %993 = vmatpush.msra.mxu0 %v959
    %994 = vmatpush.msra.mxu0 %v958
    %995 = vmatpush.msra.mxu0 %v957
    %996 = vmatpush.msra.mxu0 %v956
    %997 = vmatmul.f32.gmra.mxu0 %v970
    %v998 = vpop.f32.mrf.mxu0
    %v999 = vadd.f32 %v968, %v998
    %1000 = vmatmul.f32.gmra.mxu0 %v973
    %v1001 = vpop.f32.mrf.mxu0
    %v1002 = vadd.f32 %v968, %v1001
    %1003 = vmatmul.f32.gmra.mxu0 %v976
    %v1004 = vpop.f32.mrf.mxu0
    %v1005 = vadd.f32 %v968, %v1004
    %1006 = vmatmul.f32.gmra.mxu0 %v979
    %v1007 = vpop.f32.mrf.mxu0
    %v1008 = vadd.f32 %v968, %v1007
    %1009 = vdwg.mxu0
    %v1010 = vld [vmem:[%s4] sm:$0xff]
    %v1011 = vld [vmem:[%s4 + $0x8] sm:$0xff]
    %v1012 = vld [vmem:[%s4 + $0x10] sm:$0xff]
    %v1013 = vld [vmem:[%s4 + $0x18] sm:$0xff]
    %v1014 = vld [vmem:[%s4 + $0x20] sm:$0xff]
    %v1015 = vld [vmem:[%s4 + $0x28] sm:$0xff]
    %v1016 = vld [vmem:[%s4 + $0x30] sm:$0xff]
    %v1017 = vld [vmem:[%s4 + $0x38] sm:$0xff]
    %v1018 = vld [vmem:[%s4 + $0x40] sm:$0xff]
    %v1019 = vld [vmem:[%s4 + $0x48] sm:$0xff]
    %v1020 = vld [vmem:[%s4 + $0x50] sm:$0xff]
    %v1021 = vld [vmem:[%s4 + $0x58] sm:$0xff]
    %v1022 = vld [vmem:[%s4 + $0x60] sm:$0xff]
    %v1023 = vld [vmem:[%s4 + $0x68] sm:$0xff]
    %v1024 = vld [vmem:[%s4 + $0x70] sm:$0xff]
    %v1025 = vld [vmem:[%s4 + $0x78] sm:$0xff]
    %v1026 = vld [vmem:[%s4 + $0x80] sm:$0xff]
    %v1027 = vld [vmem:[%s4 + $0x88] sm:$0xff]
    %v1028 = vld [vmem:[%s4 + $0x90] sm:$0xff]
    %v1029 = vld [vmem:[%s4 + $0x98] sm:$0xff]
    %v1030 = vld [vmem:[%s4 + $0xa0] sm:$0xff]
    %v1031 = vld [vmem:[%s4 + $0xa8] sm:$0xff]
    %v1032 = vld [vmem:[%s4 + $0xb0] sm:$0xff]
    %v1033 = vld [vmem:[%s4 + $0xb8] sm:$0xff]
    %v1034 = vld [vmem:[%s4 + $0xc0] sm:$0xff]
    %v1035 = vld [vmem:[%s4 + $0xc8] sm:$0xff]
    %v1036 = vld [vmem:[%s4 + $0xd0] sm:$0xff]
    %v1037 = vld [vmem:[%s4 + $0xd8] sm:$0xff]
    %v1038 = vld [vmem:[%s4 + $0xe0] sm:$0xff]
    %v1039 = vld [vmem:[%s4 + $0xe8] sm:$0xff]
    %v1040 = vld [vmem:[%s4 + $0xf0] sm:$0xff]
    %v1041 = vld [vmem:[%s4 + $0xf8] sm:$0xff]
    %v1042 = vld [vmem:[%s4 + $0x100] sm:$0xff]
    %v1043 = vld [vmem:[%s4 + $0x108] sm:$0xff]
    %v1044 = vld [vmem:[%s4 + $0x110] sm:$0xff]
    %v1045 = vld [vmem:[%s4 + $0x118] sm:$0xff]
    %s1046 = scalar_lea.vmem %s7, 5
    %v1047 = vld [vmem:[%s1046] ss:$8 sm:$0x7]
    %v1049 = vperm.slane %v1047, 0
    %v1050 = vperm.slane %v1047, 1
    %v1051 = vperm.slane %v1047, 2
    %v1056 = vsel %vm101, %v999, 0
    %v1059 = vsel %vm101, %v1002, 0
    %v1062 = vsel %vm101, %v1005, 0
    %v1065 = vsel %vm101, %v1008, 0
    %1067 = vmatpush.msra.mxu0 0.0
    %1068 = vmatpush.msra.mxu0 0.0
    %1069 = vmatpush.msra.mxu0 0.0
    %1070 = vmatpush.msra.mxu0 0.0
    %1071 = vmatpush.msra.mxu0 %v1043
    %1072 = vmatpush.msra.mxu0 %v1040
    %1073 = vmatpush.msra.mxu0 %v1037
    %1074 = vmatpush.msra.mxu0 %v1034
    %1075 = vmatpush.msra.mxu0 %v1031
    %1076 = vmatpush.msra.mxu0 %v1028
    %1077 = vmatpush.msra.mxu0 %v1025
    %1078 = vmatpush.msra.mxu0 %v1022
    %1079 = vmatpush.msra.mxu0 %v1019
    %1080 = vmatpush.msra.mxu0 %v1016
    %1081 = vmatpush.msra.mxu0 %v1013
    %1082 = vmatpush.msra.mxu0 %v1010
    %1083 = vmatmul.f32.gmra.mxu0 %v1056
    %v1084 = vpop.f32.mrf.mxu0
    %v1085 = vadd.f32 %v1049, %v1084
    %1086 = vmatmul.f32.gmra.mxu0 %v1059
    %v1087 = vpop.f32.mrf.mxu0
    %v1088 = vadd.f32 %v1049, %v1087
    %1089 = vmatmul.f32.gmra.mxu0 %v1062
    %v1090 = vpop.f32.mrf.mxu0
    %v1091 = vadd.f32 %v1049, %v1090
    %1092 = vmatmul.f32.gmra.mxu0 %v1065
    %v1093 = vpop.f32.mrf.mxu0
    %v1094 = vadd.f32 %v1049, %v1093
    %1095 = vdwg.mxu0
    %1096 = vmatpush.msra.mxu0 0.0
    %1097 = vmatpush.msra.mxu0 0.0
    %1098 = vmatpush.msra.mxu0 0.0
    %1099 = vmatpush.msra.mxu0 0.0
    %1100 = vmatpush.msra.mxu0 %v1044
    %1101 = vmatpush.msra.mxu0 %v1041
    %1102 = vmatpush.msra.mxu0 %v1038
    %1103 = vmatpush.msra.mxu0 %v1035
    %1104 = vmatpush.msra.mxu0 %v1032
    %1105 = vmatpush.msra.mxu0 %v1029
    %1106 = vmatpush.msra.mxu0 %v1026
    %1107 = vmatpush.msra.mxu0 %v1023
    %1108 = vmatpush.msra.mxu0 %v1020
    %1109 = vmatpush.msra.mxu0 %v1017
    %1110 = vmatpush.msra.mxu0 %v1014
    %1111 = vmatpush.msra.mxu0 %v1011
    %1112 = vmatmul.f32.gmra.mxu0 %v1056
    %v1113 = vpop.f32.mrf.mxu0
    %v1114 = vadd.f32 %v1050, %v1113
    %1115 = vmatmul.f32.gmra.mxu0 %v1059
    %v1116 = vpop.f32.mrf.mxu0
    %v1117 = vadd.f32 %v1050, %v1116
    %1118 = vmatmul.f32.gmra.mxu0 %v1062
    %v1119 = vpop.f32.mrf.mxu0
    %v1120 = vadd.f32 %v1050, %v1119
    %1121 = vmatmul.f32.gmra.mxu0 %v1065
    %v1122 = vpop.f32.mrf.mxu0
    %v1123 = vadd.f32 %v1050, %v1122
    %1124 = vdwg.mxu0
    %1125 = vmatpush.msra.mxu0 0.0
    %1126 = vmatpush.msra.mxu0 0.0
    %1127 = vmatpush.msra.mxu0 0.0
    %1128 = vmatpush.msra.mxu0 0.0
    %1129 = vmatpush.msra.mxu0 %v1045
    %1130 = vmatpush.msra.mxu0 %v1042
    %1131 = vmatpush.msra.mxu0 %v1039
    %1132 = vmatpush.msra.mxu0 %v1036
    %1133 = vmatpush.msra.mxu0 %v1033
    %1134 = vmatpush.msra.mxu0 %v1030
    %1135 = vmatpush.msra.mxu0 %v1027
    %1136 = vmatpush.msra.mxu0 %v1024
    %1137 = vmatpush.msra.mxu0 %v1021
    %1138 = vmatpush.msra.mxu0 %v1018
    %1139 = vmatpush.msra.mxu0 %v1015
    %1140 = vmatpush.msra.mxu0 %v1012
    %1141 = vmatmul.f32.gmra.mxu0 %v1056
    %v1142 = vpop.f32.mrf.mxu0
    %v1143 = vadd.f32 %v1051, %v1142
    %1144 = vmatmul.f32.gmra.mxu0 %v1059
    %v1145 = vpop.f32.mrf.mxu0
    %v1146 = vadd.f32 %v1051, %v1145
    %1147 = vmatmul.f32.gmra.mxu0 %v1062
    %v1148 = vpop.f32.mrf.mxu0
    %v1149 = vadd.f32 %v1051, %v1148
    %1150 = vmatmul.f32.gmra.mxu0 %v1065
    %v1151 = vpop.f32.mrf.mxu0
    %v1152 = vadd.f32 %v1051, %v1151
    %1153 = vdwg.mxu0
    %v1154 = vmul.f32 %v1085, 0.5
    %v1155 = vmul.f32 %v1114, 0.5
    %v1156 = vmul.f32 %v1143, 0.5
    %v1157 = vmul.f32 %v1088, 0.5
    %v1158 = vmul.f32 %v1117, 0.5
    %v1159 = vmul.f32 %v1146, 0.5
    %v1160 = vmul.f32 %v1091, 0.5
    %v1161 = vmul.f32 %v1120, 0.5
    %v1162 = vmul.f32 %v1149, 0.5
    %v1163 = vmul.f32 %v1094, 0.5
    %v1164 = vmul.f32 %v1123, 0.5
    %v1165 = vmul.f32 %v1152, 0.5
    %v1166 = vmul.f32 %v1085, 0.70710677
    %v1167 = vmul.f32 %v1114, 0.70710677
    %v1168 = vmul.f32 %v1143, 0.70710677
    %v1169 = vmul.f32 %v1088, 0.70710677
    %v1170 = vmul.f32 %v1117, 0.70710677
    %v1171 = vmul.f32 %v1146, 0.70710677
    %v1172 = vmul.f32 %v1091, 0.70710677
    %v1173 = vmul.f32 %v1120, 0.70710677
    %v1174 = vmul.f32 %v1149, 0.70710677
    %v1175 = vmul.f32 %v1094, 0.70710677
    %v1176 = vmul.f32 %v1123, 0.70710677
    %v1177 = vmul.f32 %v1152, 0.70710677
    %vm1178 = vcmp.ge.f32.partialorder %v1166, 0.0
    %vm1179 = vcmp.ge.f32.partialorder %v1167, 0.0
    %vm1180 = vcmp.ge.f32.partialorder %v1168, 0.0
    %vm1181 = vcmp.ge.f32.partialorder %v1169, 0.0
    %vm1182 = vcmp.ge.f32.partialorder %v1170, 0.0
    %vm1183 = vcmp.ge.f32.partialorder %v1171, 0.0
    %vm1184 = vcmp.ge.f32.partialorder %v1172, 0.0
    %vm1185 = vcmp.ge.f32.partialorder %v1173, 0.0
    %vm1186 = vcmp.ge.f32.partialorder %v1174, 0.0
    %vm1187 = vcmp.ge.f32.partialorder %v1175, 0.0
    %vm1188 = vcmp.ge.f32.partialorder %v1176, 0.0
    %vm1189 = vcmp.ge.f32.partialorder %v1177, 0.0
    %v1190 = vsel %vm1178, 1.0, -1.0
    %v1191 = vsel %vm1179, 1.0, -1.0
    %v1192 = vsel %vm1180, 1.0, -1.0
    %v1193 = vsel %vm1181, 1.0, -1.0
    %v1194 = vsel %vm1182, 1.0, -1.0
    %v1195 = vsel %vm1183, 1.0, -1.0
    %v1196 = vsel %vm1184, 1.0, -1.0
    %v1197 = vsel %vm1185, 1.0, -1.0
    %v1198 = vsel %vm1186, 1.0, -1.0
    %v1199 = vsel %vm1187, 1.0, -1.0
    %v1200 = vsel %vm1188, 1.0, -1.0
    %v1201 = vsel %vm1189, 1.0, -1.0
    %v1202 = vand.u32 2147483647, %v1166
    %v1203 = vand.u32 2147483647, %v1167
    %v1204 = vand.u32 2147483647, %v1168
    %v1205 = vand.u32 2147483647, %v1169
    %v1206 = vand.u32 2147483647, %v1170
    %v1207 = vand.u32 2147483647, %v1171
    %v1208 = vand.u32 2147483647, %v1172
    %v1209 = vand.u32 2147483647, %v1173
    %v1210 = vand.u32 2147483647, %v1174
    %v1211 = vand.u32 2147483647, %v1175
    %v1212 = vand.u32 2147483647, %v1176
    %v1213 = vand.u32 2147483647, %v1177
    %v1214 = vmul.f32 %v1202, 0.3275911
    %v1215 = vmul.f32 %v1203, 0.3275911
    %v1216 = vmul.f32 %v1204, 0.3275911
    %v1217 = vmul.f32 %v1205, 0.3275911
    %v1218 = vmul.f32 %v1206, 0.3275911
    %v1219 = vmul.f32 %v1207, 0.3275911
    %v1220 = vmul.f32 %v1208, 0.3275911
    %v1221 = vmul.f32 %v1209, 0.3275911
    %v1222 = vmul.f32 %v1210, 0.3275911
    %v1223 = vmul.f32 %v1211, 0.3275911
    %v1224 = vmul.f32 %v1212, 0.3275911
    %v1225 = vmul.f32 %v1213, 0.3275911
    %v1226 = vadd.f32 %v1214, 1.0
    %v1227 = vadd.f32 %v1215, 1.0
    %v1228 = vadd.f32 %v1216, 1.0
    %v1229 = vadd.f32 %v1217, 1.0
    %v1230 = vadd.f32 %v1218, 1.0
    %v1231 = vadd.f32 %v1219, 1.0
    %v1232 = vadd.f32 %v1220, 1.0
    %v1233 = vadd.f32 %v1221, 1.0
    %v1234 = vadd.f32 %v1222, 1.0
    %v1235 = vadd.f32 %v1223, 1.0
    %v1236 = vadd.f32 %v1224, 1.0
    %v1237 = vadd.f32 %v1225, 1.0
    %v1238 = vrcp.pop %v1226
    %v1239 = vmul.f32 %v1226, %v1238
    %v1240 = vsub.f32 1.0, %v1239
    %v1241 = vmul.f32 %v1238, %v1240
    %v1242 = vadd.f32 %v1238, %v1241
    %vm1243 = vweird.f32 %v1226
    %vm1244 = vweird.f32 %v1238
    %vm1245 = vmor %vm1243, %vm1244
    %v1246 = vsel %vm1245, %v1238, %v1242
    %v1247 = vand.u32 2147483647, %v1226
    %vm1248 = vcmp.eq.f32.partialorder %v1247, 8.507059e+37
    %v1249 = vand.u32 %v1226, 2147483648
    %v1250 = vor.u32 1.1754944e-38, %v1249
    %v1251 = vsel %vm1248, %v1250, %v1246
    %v1252 = vmul.f32 1.0, %v1251
    %v1253 = vrcp.pop %v1227
    %v1254 = vmul.f32 %v1227, %v1253
    %v1255 = vsub.f32 1.0, %v1254
    %v1256 = vmul.f32 %v1253, %v1255
    %v1257 = vadd.f32 %v1253, %v1256
    %vm1258 = vweird.f32 %v1227
    %vm1259 = vweird.f32 %v1253
    %vm1260 = vmor %vm1258, %vm1259
    %v1261 = vsel %vm1260, %v1253, %v1257
    %v1262 = vand.u32 2147483647, %v1227
    %vm1263 = vcmp.eq.f32.partialorder %v1262, 8.507059e+37
    %v1264 = vand.u32 %v1227, 2147483648
    %v1265 = vor.u32 1.1754944e-38, %v1264
    %v1266 = vsel %vm1263, %v1265, %v1261
    %v1267 = vmul.f32 1.0, %v1266
    %v1268 = vrcp.pop %v1228
    %v1269 = vmul.f32 %v1228, %v1268
    %v1270 = vsub.f32 1.0, %v1269
    %v1271 = vmul.f32 %v1268, %v1270
    %v1272 = vadd.f32 %v1268, %v1271
    %vm1273 = vweird.f32 %v1228
    %vm1274 = vweird.f32 %v1268
    %vm1275 = vmor %vm1273, %vm1274
    %v1276 = vsel %vm1275, %v1268, %v1272
    %v1277 = vand.u32 2147483647, %v1228
    %vm1278 = vcmp.eq.f32.partialorder %v1277, 8.507059e+37
    %v1279 = vand.u32 %v1228, 2147483648
    %v1280 = vor.u32 1.1754944e-38, %v1279
    %v1281 = vsel %vm1278, %v1280, %v1276
    %v1282 = vmul.f32 1.0, %v1281
    %v1283 = vrcp.pop %v1229
    %v1284 = vmul.f32 %v1229, %v1283
    %v1285 = vsub.f32 1.0, %v1284
    %v1286 = vmul.f32 %v1283, %v1285
    %v1287 = vadd.f32 %v1283, %v1286
    %vm1288 = vweird.f32 %v1229
    %vm1289 = vweird.f32 %v1283
    %vm1290 = vmor %vm1288, %vm1289
    %v1291 = vsel %vm1290, %v1283, %v1287
    %v1292 = vand.u32 2147483647, %v1229
    %vm1293 = vcmp.eq.f32.partialorder %v1292, 8.507059e+37
    %v1294 = vand.u32 %v1229, 2147483648
    %v1295 = vor.u32 1.1754944e-38, %v1294
    %v1296 = vsel %vm1293, %v1295, %v1291
    %v1297 = vmul.f32 1.0, %v1296
    %v1298 = vrcp.pop %v1230
    %v1299 = vmul.f32 %v1230, %v1298
    %v1300 = vsub.f32 1.0, %v1299
    %v1301 = vmul.f32 %v1298, %v1300
    %v1302 = vadd.f32 %v1298, %v1301
    %vm1303 = vweird.f32 %v1230
    %vm1304 = vweird.f32 %v1298
    %vm1305 = vmor %vm1303, %vm1304
    %v1306 = vsel %vm1305, %v1298, %v1302
    %v1307 = vand.u32 2147483647, %v1230
    %vm1308 = vcmp.eq.f32.partialorder %v1307, 8.507059e+37
    %v1309 = vand.u32 %v1230, 2147483648
    %v1310 = vor.u32 1.1754944e-38, %v1309
    %v1311 = vsel %vm1308, %v1310, %v1306
    %v1312 = vmul.f32 1.0, %v1311
    %v1313 = vrcp.pop %v1231
    %v1314 = vmul.f32 %v1231, %v1313
    %v1315 = vsub.f32 1.0, %v1314
    %v1316 = vmul.f32 %v1313, %v1315
    %v1317 = vadd.f32 %v1313, %v1316
    %vm1318 = vweird.f32 %v1231
    %vm1319 = vweird.f32 %v1313
    %vm1320 = vmor %vm1318, %vm1319
    %v1321 = vsel %vm1320, %v1313, %v1317
    %v1322 = vand.u32 2147483647, %v1231
    %vm1323 = vcmp.eq.f32.partialorder %v1322, 8.507059e+37
    %v1324 = vand.u32 %v1231, 2147483648
    %v1325 = vor.u32 1.1754944e-38, %v1324
    %v1326 = vsel %vm1323, %v1325, %v1321
    %v1327 = vmul.f32 1.0, %v1326
    %v1328 = vrcp.pop %v1232
    %v1329 = vmul.f32 %v1232, %v1328
    %v1330 = vsub.f32 1.0, %v1329
    %v1331 = vmul.f32 %v1328, %v1330
    %v1332 = vadd.f32 %v1328, %v1331
    %vm1333 = vweird.f32 %v1232
    %vm1334 = vweird.f32 %v1328
    %vm1335 = vmor %vm1333, %vm1334
    %v1336 = vsel %vm1335, %v1328, %v1332
    %v1337 = vand.u32 2147483647, %v1232
    %vm1338 = vcmp.eq.f32.partialorder %v1337, 8.507059e+37
    %v1339 = vand.u32 %v1232, 2147483648
    %v1340 = vor.u32 1.1754944e-38, %v1339
    %v1341 = vsel %vm1338, %v1340, %v1336
    %v1342 = vmul.f32 1.0, %v1341
    %v1343 = vrcp.pop %v1233
    %v1344 = vmul.f32 %v1233, %v1343
    %v1345 = vsub.f32 1.0, %v1344
    %v1346 = vmul.f32 %v1343, %v1345
    %v1347 = vadd.f32 %v1343, %v1346
    %vm1348 = vweird.f32 %v1233
    %vm1349 = vweird.f32 %v1343
    %vm1350 = vmor %vm1348, %vm1349
    %v1351 = vsel %vm1350, %v1343, %v1347
    %v1352 = vand.u32 2147483647, %v1233
    %vm1353 = vcmp.eq.f32.partialorder %v1352, 8.507059e+37
    %v1354 = vand.u32 %v1233, 2147483648
    %v1355 = vor.u32 1.1754944e-38, %v1354
    %v1356 = vsel %vm1353, %v1355, %v1351
    %v1357 = vmul.f32 1.0, %v1356
    %v1358 = vrcp.pop %v1234
    %v1359 = vmul.f32 %v1234, %v1358
    %v1360 = vsub.f32 1.0, %v1359
    %v1361 = vmul.f32 %v1358, %v1360
    %v1362 = vadd.f32 %v1358, %v1361
    %vm1363 = vweird.f32 %v1234
    %vm1364 = vweird.f32 %v1358
    %vm1365 = vmor %vm1363, %vm1364
    %v1366 = vsel %vm1365, %v1358, %v1362
    %v1367 = vand.u32 2147483647, %v1234
    %vm1368 = vcmp.eq.f32.partialorder %v1367, 8.507059e+37
    %v1369 = vand.u32 %v1234, 2147483648
    %v1370 = vor.u32 1.1754944e-38, %v1369
    %v1371 = vsel %vm1368, %v1370, %v1366
    %v1372 = vmul.f32 1.0, %v1371
    %v1373 = vrcp.pop %v1235
    %v1374 = vmul.f32 %v1235, %v1373
    %v1375 = vsub.f32 1.0, %v1374
    %v1376 = vmul.f32 %v1373, %v1375
    %v1377 = vadd.f32 %v1373, %v1376
    %vm1378 = vweird.f32 %v1235
    %vm1379 = vweird.f32 %v1373
    %vm1380 = vmor %vm1378, %vm1379
    %v1381 = vsel %vm1380, %v1373, %v1377
    %v1382 = vand.u32 2147483647, %v1235
    %vm1383 = vcmp.eq.f32.partialorder %v1382, 8.507059e+37
    %v1384 = vand.u32 %v1235, 2147483648
    %v1385 = vor.u32 1.1754944e-38, %v1384
    %v1386 = vsel %vm1383, %v1385, %v1381
    %v1387 = vmul.f32 1.0, %v1386
    %v1388 = vrcp.pop %v1236
    %v1389 = vmul.f32 %v1236, %v1388
    %v1390 = vsub.f32 1.0, %v1389
    %v1391 = vmul.f32 %v1388, %v1390
    %v1392 = vadd.f32 %v1388, %v1391
    %vm1393 = vweird.f32 %v1236
    %vm1394 = vweird.f32 %v1388
    %vm1395 = vmor %vm1393, %vm1394
    %v1396 = vsel %vm1395, %v1388, %v1392
    %v1397 = vand.u32 2147483647, %v1236
    %vm1398 = vcmp.eq.f32.partialorder %v1397, 8.507059e+37
    %v1399 = vand.u32 %v1236, 2147483648
    %v1400 = vor.u32 1.1754944e-38, %v1399
    %v1401 = vsel %vm1398, %v1400, %v1396
    %v1402 = vmul.f32 1.0, %v1401
    %v1403 = vrcp.pop %v1237
    %v1404 = vmul.f32 %v1237, %v1403
    %v1405 = vsub.f32 1.0, %v1404
    %v1406 = vmul.f32 %v1403, %v1405
    %v1407 = vadd.f32 %v1403, %v1406
    %vm1408 = vweird.f32 %v1237
    %vm1409 = vweird.f32 %v1403
    %vm1410 = vmor %vm1408, %vm1409
    %v1411 = vsel %vm1410, %v1403, %v1407
    %v1412 = vand.u32 2147483647, %v1237
    %vm1413 = vcmp.eq.f32.partialorder %v1412, 8.507059e+37
    %v1414 = vand.u32 %v1237, 2147483648
    %v1415 = vor.u32 1.1754944e-38, %v1414
    %v1416 = vsel %vm1413, %v1415, %v1411
    %v1417 = vmul.f32 1.0, %v1416
    %v1418 = vmul.f32 %v1252, 1.0614054
    %v1419 = vmul.f32 %v1267, 1.0614054
    %v1420 = vmul.f32 %v1282, 1.0614054
    %v1421 = vmul.f32 %v1297, 1.0614054
    %v1422 = vmul.f32 %v1312, 1.0614054
    %v1423 = vmul.f32 %v1327, 1.0614054
    %v1424 = vmul.f32 %v1342, 1.0614054
    %v1425 = vmul.f32 %v1357, 1.0614054
    %v1426 = vmul.f32 %v1372, 1.0614054
    %v1427 = vmul.f32 %v1387, 1.0614054
    %v1428 = vmul.f32 %v1402, 1.0614054
    %v1429 = vmul.f32 %v1417, 1.0614054
    %v1430 = vadd.f32 %v1418, -1.4531521
    %v1431 = vadd.f32 %v1419, -1.4531521
    %v1432 = vadd.f32 %v1420, -1.4531521
    %v1433 = vadd.f32 %v1421, -1.4531521
    %v1434 = vadd.f32 %v1422, -1.4531521
    %v1435 = vadd.f32 %v1423, -1.4531521
    %v1436 = vadd.f32 %v1424, -1.4531521
    %v1437 = vadd.f32 %v1425, -1.4531521
    %v1438 = vadd.f32 %v1426, -1.4531521
    %v1439 = vadd.f32 %v1427, -1.4531521
    %v1440 = vadd.f32 %v1428, -1.4531521
    %v1441 = vadd.f32 %v1429, -1.4531521
    %v1442 = vmul.f32 %v1430, %v1252
    %v1443 = vmul.f32 %v1431, %v1267
    %v1444 = vmul.f32 %v1432, %v1282
    %v1445 = vmul.f32 %v1433, %v1297
    %v1446 = vmul.f32 %v1434, %v1312
    %v1447 = vmul.f32 %v1435, %v1327
    %v1448 = vmul.f32 %v1436, %v1342
    %v1449 = vmul.f32 %v1437, %v1357
    %v1450 = vmul.f32 %v1438, %v1372
    %v1451 = vmul.f32 %v1439, %v1387
    %v1452 = vmul.f32 %v1440, %v1402
    %v1453 = vmul.f32 %v1441, %v1417
    %v1454 = vadd.f32 %v1442, 1.4214138
    %v1455 = vadd.f32 %v1443, 1.4214138
    %v1456 = vadd.f32 %v1444, 1.4214138
    %v1457 = vadd.f32 %v1445, 1.4214138
    %v1458 = vadd.f32 %v1446, 1.4214138
    %v1459 = vadd.f32 %v1447, 1.4214138
    %v1460 = vadd.f32 %v1448, 1.4214138
    %v1461 = vadd.f32 %v1449, 1.4214138
    %v1462 = vadd.f32 %v1450, 1.4214138
    %v1463 = vadd.f32 %v1451, 1.4214138
    %v1464 = vadd.f32 %v1452, 1.4214138
    %v1465 = vadd.f32 %v1453, 1.4214138
    %v1466 = vmul.f32 %v1454, %v1252
    %v1467 = vmul.f32 %v1455, %v1267
    %v1468 = vmul.f32 %v1456, %v1282
    %v1469 = vmul.f32 %v1457, %v1297
    %v1470 = vmul.f32 %v1458, %v1312
    %v1471 = vmul.f32 %v1459, %v1327
    %v1472 = vmul.f32 %v1460, %v1342
    %v1473 = vmul.f32 %v1461, %v1357
    %v1474 = vmul.f32 %v1462, %v1372
    %v1475 = vmul.f32 %v1463, %v1387
    %v1476 = vmul.f32 %v1464, %v1402
    %v1477 = vmul.f32 %v1465, %v1417
    %v1478 = vadd.f32 %v1466, -0.28449672
    %v1479 = vadd.f32 %v1467, -0.28449672
    %v1480 = vadd.f32 %v1468, -0.28449672
    %v1481 = vadd.f32 %v1469, -0.28449672
    %v1482 = vadd.f32 %v1470, -0.28449672
    %v1483 = vadd.f32 %v1471, -0.28449672
    %v1484 = vadd.f32 %v1472, -0.28449672
    %v1485 = vadd.f32 %v1473, -0.28449672
    %v1486 = vadd.f32 %v1474, -0.28449672
    %v1487 = vadd.f32 %v1475, -0.28449672
    %v1488 = vadd.f32 %v1476, -0.28449672
    %v1489 = vadd.f32 %v1477, -0.28449672
    %v1490 = vmul.f32 %v1478, %v1252
    %v1491 = vmul.f32 %v1479, %v1267
    %v1492 = vmul.f32 %v1480, %v1282
    %v1493 = vmul.f32 %v1481, %v1297
    %v1494 = vmul.f32 %v1482, %v1312
    %v1495 = vmul.f32 %v1483, %v1327
    %v1496 = vmul.f32 %v1484, %v1342
    %v1497 = vmul.f32 %v1485, %v1357
    %v1498 = vmul.f32 %v1486, %v1372
    %v1499 = vmul.f32 %v1487, %v1387
    %v1500 = vmul.f32 %v1488, %v1402
    %v1501 = vmul.f32 %v1489, %v1417
    %v1502 = vadd.f32 %v1490, 0.2548296
    %v1503 = vadd.f32 %v1491, 0.2548296
    %v1504 = vadd.f32 %v1492, 0.2548296
    %v1505 = vadd.f32 %v1493, 0.2548296
    %v1506 = vadd.f32 %v1494, 0.2548296
    %v1507 = vadd.f32 %v1495, 0.2548296
    %v1508 = vadd.f32 %v1496, 0.2548296
    %v1509 = vadd.f32 %v1497, 0.2548296
    %v1510 = vadd.f32 %v1498, 0.2548296
    %v1511 = vadd.f32 %v1499, 0.2548296
    %v1512 = vadd.f32 %v1500, 0.2548296
    %v1513 = vadd.f32 %v1501, 0.2548296
    %v1514 = vmul.f32 %v1502, %v1252
    %v1515 = vmul.f32 %v1503, %v1267
    %v1516 = vmul.f32 %v1504, %v1282
    %v1517 = vmul.f32 %v1505, %v1297
    %v1518 = vmul.f32 %v1506, %v1312
    %v1519 = vmul.f32 %v1507, %v1327
    %v1520 = vmul.f32 %v1508, %v1342
    %v1521 = vmul.f32 %v1509, %v1357
    %v1522 = vmul.f32 %v1510, %v1372
    %v1523 = vmul.f32 %v1511, %v1387
    %v1524 = vmul.f32 %v1512, %v1402
    %v1525 = vmul.f32 %v1513, %v1417
    %v1526 = vsub.f32 0.0, %v1202
    %v1527 = vsub.f32 0.0, %v1203
    %v1528 = vsub.f32 0.0, %v1204
    %v1529 = vsub.f32 0.0, %v1205
    %v1530 = vsub.f32 0.0, %v1206
    %v1531 = vsub.f32 0.0, %v1207
    %v1532 = vsub.f32 0.0, %v1208
    %v1533 = vsub.f32 0.0, %v1209
    %v1534 = vsub.f32 0.0, %v1210
    %v1535 = vsub.f32 0.0, %v1211
    %v1536 = vsub.f32 0.0, %v1212
    %v1537 = vsub.f32 0.0, %v1213
    %v1538 = vmul.f32 %v1526, %v1202
    %v1539 = vmul.f32 %v1527, %v1203
    %v1540 = vmul.f32 %v1528, %v1204
    %v1541 = vmul.f32 %v1529, %v1205
    %v1542 = vmul.f32 %v1530, %v1206
    %v1543 = vmul.f32 %v1531, %v1207
    %v1544 = vmul.f32 %v1532, %v1208
    %v1545 = vmul.f32 %v1533, %v1209
    %v1546 = vmul.f32 %v1534, %v1210
    %v1547 = vmul.f32 %v1535, %v1211
    %v1548 = vmul.f32 %v1536, %v1212
    %v1549 = vmul.f32 %v1537, %v1213
    %v1550 = vmul.f32 %v1538, 1.442695
    %v1551 = vpow.pop %v1550
    %v1552 = vmul.f32 %v1539, 1.442695
    %v1553 = vpow.pop %v1552
    %v1554 = vmul.f32 %v1540, 1.442695
    %v1555 = vpow.pop %v1554
    %v1556 = vmul.f32 %v1541, 1.442695
    %v1557 = vpow.pop %v1556
    %v1558 = vmul.f32 %v1542, 1.442695
    %v1559 = vpow.pop %v1558
    %v1560 = vmul.f32 %v1543, 1.442695
    %v1561 = vpow.pop %v1560
    %v1562 = vmul.f32 %v1544, 1.442695
    %v1563 = vpow.pop %v1562
    %v1564 = vmul.f32 %v1545, 1.442695
    %v1565 = vpow.pop %v1564
    %v1566 = vmul.f32 %v1546, 1.442695
    %v1567 = vpow.pop %v1566
    %v1568 = vmul.f32 %v1547, 1.442695
    %v1569 = vpow.pop %v1568
    %v1570 = vmul.f32 %v1548, 1.442695
    %v1571 = vpow.pop %v1570
    %v1572 = vmul.f32 %v1549, 1.442695
    %v1573 = vpow.pop %v1572
    %v1574 = vmul.f32 %v1514, %v1551
    %v1575 = vmul.f32 %v1515, %v1553
    %v1576 = vmul.f32 %v1516, %v1555
    %v1577 = vmul.f32 %v1517, %v1557
    %v1578 = vmul.f32 %v1518, %v1559
    %v1579 = vmul.f32 %v1519, %v1561
    %v1580 = vmul.f32 %v1520, %v1563
    %v1581 = vmul.f32 %v1521, %v1565
    %v1582 = vmul.f32 %v1522, %v1567
    %v1583 = vmul.f32 %v1523, %v1569
    %v1584 = vmul.f32 %v1524, %v1571
    %v1585 = vmul.f32 %v1525, %v1573
    %v1586 = vsub.f32 1.0, %v1574
    %v1587 = vsub.f32 1.0, %v1575
    %v1588 = vsub.f32 1.0, %v1576
    %v1589 = vsub.f32 1.0, %v1577
    %v1590 = vsub.f32 1.0, %v1578
    %v1591 = vsub.f32 1.0, %v1579
    %v1592 = vsub.f32 1.0, %v1580
    %v1593 = vsub.f32 1.0, %v1581
    %v1594 = vsub.f32 1.0, %v1582
    %v1595 = vsub.f32 1.0, %v1583
    %v1596 = vsub.f32 1.0, %v1584
    %v1597 = vsub.f32 1.0, %v1585
    %v1598 = vmul.f32 %v1190, %v1586
    %v1599 = vmul.f32 %v1191, %v1587
    %v1600 = vmul.f32 %v1192, %v1588
    %v1601 = vmul.f32 %v1193, %v1589
    %v1602 = vmul.f32 %v1194, %v1590
    %v1603 = vmul.f32 %v1195, %v1591
    %v1604 = vmul.f32 %v1196, %v1592
    %v1605 = vmul.f32 %v1197, %v1593
    %v1606 = vmul.f32 %v1198, %v1594
    %v1607 = vmul.f32 %v1199, %v1595
    %v1608 = vmul.f32 %v1200, %v1596
    %v1609 = vmul.f32 %v1201, %v1597
    %v1610 = vadd.f32 %v1598, 1.0
    %v1611 = vadd.f32 %v1599, 1.0
    %v1612 = vadd.f32 %v1600, 1.0
    %v1613 = vadd.f32 %v1601, 1.0
    %v1614 = vadd.f32 %v1602, 1.0
    %v1615 = vadd.f32 %v1603, 1.0
    %v1616 = vadd.f32 %v1604, 1.0
    %v1617 = vadd.f32 %v1605, 1.0
    %v1618 = vadd.f32 %v1606, 1.0
    %v1619 = vadd.f32 %v1607, 1.0
    %v1620 = vadd.f32 %v1608, 1.0
    %v1621 = vadd.f32 %v1609, 1.0
    %v1622 = vmul.f32 %v1154, %v1610
    %v1623 = vmul.f32 %v1155, %v1611
    %v1624 = vmul.f32 %v1156, %v1612
    %v1625 = vmul.f32 %v1157, %v1613
    %v1626 = vmul.f32 %v1158, %v1614
    %v1627 = vmul.f32 %v1159, %v1615
    %v1628 = vmul.f32 %v1160, %v1616
    %v1629 = vmul.f32 %v1161, %v1617
    %v1630 = vmul.f32 %v1162, %v1618
    %v1631 = vmul.f32 %v1163, %v1619
    %v1632 = vmul.f32 %v1164, %v1620
    %v1633 = vmul.f32 %v1165, %v1621
    %v1634 = vld [vmem:[%s5] sm:$0xff]
    %v1635 = vld [vmem:[%s5 + $0x8] sm:$0xff]
    %v1636 = vld [vmem:[%s5 + $0x10] sm:$0xff]
    %v1637 = vld [vmem:[%s5 + $0x18] sm:$0xff]
    %v1638 = vld [vmem:[%s5 + $0x20] sm:$0xff]
    %v1639 = vld [vmem:[%s5 + $0x28] sm:$0xff]
    %v1640 = vld [vmem:[%s5 + $0x30] sm:$0xff]
    %v1641 = vld [vmem:[%s5 + $0x38] sm:$0xff]
    %v1642 = vld [vmem:[%s5 + $0x40] sm:$0xff]
    %v1643 = vld [vmem:[%s5 + $0x48] sm:$0xff]
    %v1644 = vld [vmem:[%s5 + $0x50] sm:$0xff]
    %v1645 = vld [vmem:[%s5 + $0x58] sm:$0xff]
    %v1646 = vld [vmem:[%s5 + $0x60] sm:$0xff]
    %v1647 = vld [vmem:[%s5 + $0x68] sm:$0xff]
    %v1648 = vld [vmem:[%s5 + $0x70] sm:$0xff]
    %v1649 = vld [vmem:[%s5 + $0x78] sm:$0xff]
    %v1650 = vld [vmem:[%s5 + $0x80] sm:$0xff]
    %v1651 = vld [vmem:[%s5 + $0x88] sm:$0xff]
    %v1652 = vld [vmem:[%s5 + $0x90] sm:$0xff]
    %v1653 = vld [vmem:[%s5 + $0x98] sm:$0xff]
    %v1654 = vld [vmem:[%s5 + $0xa0] sm:$0xff]
    %v1655 = vld [vmem:[%s5 + $0xa8] sm:$0xff]
    %v1656 = vld [vmem:[%s5 + $0xb0] sm:$0xff]
    %v1657 = vld [vmem:[%s5 + $0xb8] sm:$0xff]
    %v1658 = vld [vmem:[%s5 + $0xc0] sm:$0xff]
    %v1659 = vld [vmem:[%s5 + $0xc8] sm:$0xff]
    %v1660 = vld [vmem:[%s5 + $0xd0] sm:$0xff]
    %v1661 = vld [vmem:[%s5 + $0xd8] sm:$0xff]
    %v1662 = vld [vmem:[%s5 + $0xe0] sm:$0xff]
    %v1663 = vld [vmem:[%s5 + $0xe8] sm:$0xff]
    %v1664 = vld [vmem:[%s5 + $0xf0] sm:$0xff]
    %v1665 = vld [vmem:[%s5 + $0xf8] sm:$0xff]
    %v1666 = vld [vmem:[%s5 + $0x100] sm:$0xff]
    %v1667 = vld [vmem:[%s5 + $0x108] sm:$0xff]
    %v1668 = vld [vmem:[%s5 + $0x110] sm:$0xff]
    %v1669 = vld [vmem:[%s5 + $0x118] sm:$0xff]
    %v1670 = vld [vmem:[%s5 + $0x120] sm:$0xff]
    %v1671 = vld [vmem:[%s5 + $0x128] sm:$0xff]
    %v1672 = vld [vmem:[%s5 + $0x130] sm:$0xff]
    %v1673 = vld [vmem:[%s5 + $0x138] sm:$0xff]
    %v1674 = vld [vmem:[%s5 + $0x140] sm:$0xff]
    %v1675 = vld [vmem:[%s5 + $0x148] sm:$0xff]
    %v1676 = vld [vmem:[%s5 + $0x150] sm:$0xff]
    %v1677 = vld [vmem:[%s5 + $0x158] sm:$0xff]
    %v1678 = vld [vmem:[%s5 + $0x160] sm:$0xff]
    %v1679 = vld [vmem:[%s5 + $0x168] sm:$0xff]
    %v1680 = vld [vmem:[%s5 + $0x170] sm:$0xff]
    %v1681 = vld [vmem:[%s5 + $0x178] sm:$0xff]
    %v1682 = vld [vmem:[%s7 + $0x6] ss:$0 sm:$0xff]
    %1683 = vmatpush.msra.mxu0 %v1649
    %1684 = vmatpush.msra.mxu0 %v1648
    %1685 = vmatpush.msra.mxu0 %v1647
    %1686 = vmatpush.msra.mxu0 %v1646
    %1687 = vmatpush.msra.mxu0 %v1645
    %1688 = vmatpush.msra.mxu0 %v1644
    %1689 = vmatpush.msra.mxu0 %v1643
    %1690 = vmatpush.msra.mxu0 %v1642
    %1691 = vmatpush.msra.mxu0 %v1641
    %1692 = vmatpush.msra.mxu0 %v1640
    %1693 = vmatpush.msra.mxu0 %v1639
    %1694 = vmatpush.msra.mxu0 %v1638
    %1695 = vmatpush.msra.mxu0 %v1637
    %1696 = vmatpush.msra.mxu0 %v1636
    %1697 = vmatpush.msra.mxu0 %v1635
    %1698 = vmatpush.msra.mxu0 %v1634
    %1699 = vmatmul.f32.gmra.mxu0 %v1622
    %v1700 = vpop.f32.mrf.mxu0
    %v1701 = vadd.f32 %v1682, %v1700
    %1702 = vmatmul.f32.gmra.mxu0 %v1625
    %v1703 = vpop.f32.mrf.mxu0
    %v1704 = vadd.f32 %v1682, %v1703
    %1705 = vmatmul.f32.gmra.mxu0 %v1628
    %v1706 = vpop.f32.mrf.mxu0
    %v1707 = vadd.f32 %v1682, %v1706
    %1708 = vmatmul.f32.gmra.mxu0 %v1631
    %v1709 = vpop.f32.mrf.mxu0
    %v1710 = vadd.f32 %v1682, %v1709
    %1711 = vdwg.mxu0
    %1712 = vmatpush.msra.mxu0 %v1665
    %1713 = vmatpush.msra.mxu0 %v1664
    %1714 = vmatpush.msra.mxu0 %v1663
    %1715 = vmatpush.msra.mxu0 %v1662
    %1716 = vmatpush.msra.mxu0 %v1661
    %1717 = vmatpush.msra.mxu0 %v1660
    %1718 = vmatpush.msra.mxu0 %v1659
    %1719 = vmatpush.msra.mxu0 %v1658
    %1720 = vmatpush.msra.mxu0 %v1657
    %1721 = vmatpush.msra.mxu0 %v1656
    %1722 = vmatpush.msra.mxu0 %v1655
    %1723 = vmatpush.msra.mxu0 %v1654
    %1724 = vmatpush.msra.mxu0 %v1653
    %1725 = vmatpush.msra.mxu0 %v1652
    %1726 = vmatpush.msra.mxu0 %v1651
    %1727 = vmatpush.msra.mxu0 %v1650
    %1728 = vmatmul.f32.gmra.mxu0 %v1623
    %v1729 = vpop.f32.mrf.mxu0
    %v1730 = vadd.f32 %v1701, %v1729
    %1731 = vmatmul.f32.gmra.mxu0 %v1626
    %v1732 = vpop.f32.mrf.mxu0
    %v1733 = vadd.f32 %v1704, %v1732
    %1734 = vmatmul.f32.gmra.mxu0 %v1629
    %v1735 = vpop.f32.mrf.mxu0
    %v1736 = vadd.f32 %v1707, %v1735
    %1737 = vmatmul.f32.gmra.mxu0 %v1632
    %v1738 = vpop.f32.mrf.mxu0
    %v1739 = vadd.f32 %v1710, %v1738
    %1740 = vdwg.mxu0
    %1741 = vmatpush.msra.mxu0 %v1681
    %1742 = vmatpush.msra.mxu0 %v1680
    %1743 = vmatpush.msra.mxu0 %v1679
    %1744 = vmatpush.msra.mxu0 %v1678
    %1745 = vmatpush.msra.mxu0 %v1677
    %1746 = vmatpush.msra.mxu0 %v1676
    %1747 = vmatpush.msra.mxu0 %v1675
    %1748 = vmatpush.msra.mxu0 %v1674
    %1749 = vmatpush.msra.mxu0 %v1673
    %1750 = vmatpush.msra.mxu0 %v1672
    %1751 = vmatpush.msra.mxu0 %v1671
    %1752 = vmatpush.msra.mxu0 %v1670
    %1753 = vmatpush.msra.mxu0 %v1669
    %1754 = vmatpush.msra.mxu0 %v1668
    %1755 = vmatpush.msra.mxu0 %v1667
    %1756 = vmatpush.msra.mxu0 %v1666
    %1757 = vmatmul.f32.gmra.mxu0 %v1624
    %v1758 = vpop.f32.mrf.mxu0
    %v1759 = vadd.f32 %v1730, %v1758
    %1760 = vmatmul.f32.gmra.mxu0 %v1627
    %v1761 = vpop.f32.mrf.mxu0
    %v1762 = vadd.f32 %v1733, %v1761
    %1763 = vmatmul.f32.gmra.mxu0 %v1630
    %v1764 = vpop.f32.mrf.mxu0
    %v1765 = vadd.f32 %v1736, %v1764
    %1766 = vmatmul.f32.gmra.mxu0 %v1633
    %v1767 = vpop.f32.mrf.mxu0
    %v1768 = vadd.f32 %v1739, %v1767
    %1769 = vdwg.mxu0
    %v1770 = vld [vmem:[%s7 + $0x7] ss:$0 sm:$0xff]
    %v1771 = vld [vmem:[%s7 + $0x18] ss:$0 sm:$0xff]
    %v1772 = vsel %vm101, %v1759, 0.0
    %1773 = vadd.xlane.f32.xlu0 %v1772
    %v1774 = vpop.xlane.xlu0 %1773
    %v1775 = vsel %vm101, %v1762, 0.0
    %1776 = vadd.xlane.f32.xlu0 %v1775
    %v1777 = vpop.xlane.xlu0 %1776
    %v1778 = vsel %vm101, %v1765, 0.0
    %1779 = vadd.xlane.f32.xlu0 %v1778
    %v1780 = vpop.xlane.xlu0 %1779
    %v1781 = vsel %vm101, %v1768, 0.0
    %1782 = vadd.xlane.f32.xlu0 %v1781
    %v1783 = vpop.xlane.xlu0 %1782
    %v1784 = vmul.f32 %v1774, %v120
    %v1785 = vmul.f32 %v1777, %v120
    %v1786 = vmul.f32 %v1780, %v120
    %v1787 = vmul.f32 %v1783, %v120
    %v1788 = vsub.f32 %v1759, %v1784
    %v1789 = vsub.f32 %v1762, %v1785
    %v1790 = vsub.f32 %v1765, %v1786
    %v1791 = vsub.f32 %v1768, %v1787
    %v1792 = vmul.f32 %v1788, %v1788
    %v1793 = vmul.f32 %v1789, %v1789
    %v1794 = vmul.f32 %v1790, %v1790
    %v1795 = vmul.f32 %v1791, %v1791
    %v1796 = vsel %vm101, %v1792, 0.0
    %1797 = vadd.xlane.f32.xlu0 %v1796
    %v1798 = vpop.xlane.xlu0 %1797
    %v1799 = vsel %vm101, %v1793, 0.0
    %1800 = vadd.xlane.f32.xlu0 %v1799
    %v1801 = vpop.xlane.xlu0 %1800
    %v1802 = vsel %vm101, %v1794, 0.0
    %1803 = vadd.xlane.f32.xlu0 %v1802
    %v1804 = vpop.xlane.xlu0 %1803
    %v1805 = vsel %vm101, %v1795, 0.0
    %1806 = vadd.xlane.f32.xlu0 %v1805
    %v1807 = vpop.xlane.xlu0 %1806
    %v1808 = vmul.f32 %v1798, %v120
    %v1809 = vmul.f32 %v1801, %v120
    %v1810 = vmul.f32 %v1804, %v120
    %v1811 = vmul.f32 %v1807, %v120
    %v1812 = vadd.f32 %v1808, 1e-05
    %v1813 = vadd.f32 %v1809, 1e-05
    %v1814 = vadd.f32 %v1810, 1e-05
    %v1815 = vadd.f32 %v1811, 1e-05
    %v1816 = vrsqrt.pop %v1812
    %v1817 = vmul.f32 %v1816, %v1812
    %v1818 = vmul.f32 %v1817, %v1816
    %v1819 = vmul.f32 0.5, %v1818
    %v1820 = vsub.f32 1.5, %v1819
    %v1821 = vmul.f32 %v1816, %v1820
    %vm1822 = vweird.f32 %v1812
    %vm1823 = vweird.f32 %v1816
    %vm1824 = vmor %vm1822, %vm1823
    %v1825 = vsel %vm1824, %v1816, %v1821
    %v1826 = vrsqrt.pop %v1813
    %v1827 = vmul.f32 %v1826, %v1813
    %v1828 = vmul.f32 %v1827, %v1826
    %v1829 = vmul.f32 0.5, %v1828
    %v1830 = vsub.f32 1.5, %v1829
    %v1831 = vmul.f32 %v1826, %v1830
    %vm1832 = vweird.f32 %v1813
    %vm1833 = vweird.f32 %v1826
    %vm1834 = vmor %vm1832, %vm1833
    %v1835 = vsel %vm1834, %v1826, %v1831
    %v1836 = vrsqrt.pop %v1814
    %v1837 = vmul.f32 %v1836, %v1814
    %v1838 = vmul.f32 %v1837, %v1836
    %v1839 = vmul.f32 0.5, %v1838
    %v1840 = vsub.f32 1.5, %v1839
    %v1841 = vmul.f32 %v1836, %v1840
    %vm1842 = vweird.f32 %v1814
    %vm1843 = vweird.f32 %v1836
    %vm1844 = vmor %vm1842, %vm1843
    %v1845 = vsel %vm1844, %v1836, %v1841
    %v1846 = vrsqrt.pop %v1815
    %v1847 = vmul.f32 %v1846, %v1815
    %v1848 = vmul.f32 %v1847, %v1846
    %v1849 = vmul.f32 0.5, %v1848
    %v1850 = vsub.f32 1.5, %v1849
    %v1851 = vmul.f32 %v1846, %v1850
    %vm1852 = vweird.f32 %v1815
    %vm1853 = vweird.f32 %v1846
    %vm1854 = vmor %vm1852, %vm1853
    %v1855 = vsel %vm1854, %v1846, %v1851
    %v1856 = vmul.f32 %v1788, %v1825
    %v1857 = vmul.f32 %v1789, %v1835
    %v1858 = vmul.f32 %v1790, %v1845
    %v1859 = vmul.f32 %v1791, %v1855
    %v1860 = vmul.f32 %v1856, %v1770
    %v1861 = vmul.f32 %v1857, %v1770
    %v1862 = vmul.f32 %v1858, %v1770
    %v1863 = vmul.f32 %v1859, %v1770
    %v1864 = vadd.f32 %v1860, %v1771
    %v1865 = vadd.f32 %v1861, %v1771
    %v1866 = vadd.f32 %v1862, %v1771
    %v1867 = vadd.f32 %v1863, %v1771
    %v1868 = vadd.f32 %v999, %v1864
    %v1869 = vadd.f32 %v1002, %v1865
    %v1870 = vadd.f32 %v1005, %v1866
    %v1871 = vadd.f32 %v1008, %v1867
    %v1872 = vsel %vm101, %v1868, 0.0
    %v1873 = vsel %vm101, %v1869, 0.0
    %v1874 = vadd.f32 %v1872, %v1873
    %v1875 = vrot.slane %v1874, 4
    %v1876 = vadd.f32 %v1874, %v1875
    %v1877 = vrot.slane %v1876, 2
    %v1878 = vadd.f32 %v1876, %v1877
    %v1879 = vrot.slane %v1878, 1
    %v1880 = vadd.f32 %v1878, %v1879
    %v1881 = vsel %vm101, %v1870, 0.0
    %v1882 = vsel %vm101, %v1871, 0.0
    %v1883 = vadd.f32 %v1881, %v1882
    %v1884 = vrot.slane %v1883, 4
    %v1885 = vadd.f32 %v1883, %v1884
    %v1886 = vrot.slane %v1885, 2
    %v1887 = vadd.f32 %v1885, %v1886
    %v1888 = vrot.slane %v1887, 1
    %v1889 = vadd.f32 %v1887, %v1888
    %v1890 = vrcp.pop 16.0
    %v1891 = vmul.f32 16.0, %v1890
    %v1892 = vsub.f32 1.0, %v1891
    %v1893 = vmul.f32 %v1890, %v1892
    %v1894 = vadd.f32 %v1890, %v1893
    %vm1895 = vweird.f32 %v1890
    %v1896 = vsel %vm1895, %v1890, %v1894
    %v1897 = vmul.f32 %v1880, %v1896
    %v1898 = vmul.f32 %v1889, %v1896
    %v1899 = vld [vmem:[%s6] sm:$0xff]
    %v1900 = vld [vmem:[%s6 + $0x8] sm:$0xff]
    %v1901 = vld [vmem:[%s6 + $0x10] sm:$0xff]
    %v1902 = vld [vmem:[%s6 + $0x18] sm:$0xff]
    %v1903 = vld [vmem:[%s6 + $0x20] sm:$0xff]
    %v1904 = vld [vmem:[%s6 + $0x28] sm:$0xff]
    %v1905 = vld [vmem:[%s6 + $0x30] sm:$0xff]
    %v1906 = vld [vmem:[%s6 + $0x38] sm:$0xff]
    %v1907 = vld [vmem:[%s6 + $0x40] sm:$0xff]
    %v1908 = vld [vmem:[%s6 + $0x48] sm:$0xff]
    %v1909 = vld [vmem:[%s6 + $0x50] sm:$0xff]
    %v1910 = vld [vmem:[%s6 + $0x58] sm:$0xff]
    %v1911 = vld [vmem:[%s7 + $0x19] ss:$0 sm:$0xff]
    %vm1914 = vcmask 1041409
    %v1915 = vsel %vm1914, %v1898, %v1897
    %v1916 = vsel %vm101, %v1915, 0
    %1918 = vmatpush.msra.mxu0 0.0
    %1919 = vmatpush.msra.mxu0 0.0
    %1920 = vmatpush.msra.mxu0 0.0
    %1921 = vmatpush.msra.mxu0 0.0
    %1922 = vmatpush.msra.mxu0 %v1910
    %1923 = vmatpush.msra.mxu0 %v1909
    %1924 = vmatpush.msra.mxu0 %v1908
    %1925 = vmatpush.msra.mxu0 %v1907
    %1926 = vmatpush.msra.mxu0 %v1906
    %1927 = vmatpush.msra.mxu0 %v1905
    %1928 = vmatpush.msra.mxu0 %v1904
    %1929 = vmatpush.msra.mxu0 %v1903
    %1930 = vmatpush.msra.mxu0 %v1902
    %1931 = vmatpush.msra.mxu0 %v1901
    %1932 = vmatpush.msra.mxu0 %v1900
    %1933 = vmatpush.msra.mxu0 %v1899
    %1934 = vmatmul.f32.gmra.mxu0 %v1916
    %v1935 = vpop.f32.mrf.mxu0
    %v1936 = vadd.f32 %v1911, %v1935
    %1937 = vdwg.mxu0
    %vm1938 = vcmask 25600
    %1939 = vst.msk [vmem:[#allocation5] sm:$0x3] %vm1938, %v1936
    // Predicated region
    $region38: #{tpu_custom_call.1} parent=1 // pred_check
      _
    $region39: #{tpu_custom_call.1} parent=1 // pred_check_branch
      %1941 = sbr.rel (0) target = $region41
    $region40: #{tpu_custom_call.1} parent=1 // pred_region
      %1943 = vsyncadd [#allocation4], 0
      %s1945 = sshll.u32 [#allocation5], 4
      %s1946 = int_to_ptr.vmem [resolvable:$true] %s1945
      %s1947 = sshll.u32 %s8, 4
      %s1948 = int_to_ptr.hbm [resolvable:$true] %s1947
      %1950 = dma.vmem_to_hbm [thread:$0]  %s1946, 32, %s1948, [#allocation4]
    $region41: #{tpu_custom_call.1} parent=1 // pred_fallthru
      _
    // Predicated region
    $region42: #{tpu_custom_call.1} parent=1 // pred_check
      _
    $region43: #{tpu_custom_call.1} parent=1 // pred_check_branch
      %1952 = sbr.rel (0) target = $region45
    $region44: #{tpu_custom_call.1} parent=1 // pred_region
      %1954 = dma.done [#allocation4], 32
    $region45: #{tpu_custom_call.1} parent=1 // pred_fallthru
      _
    %1955 = vsyncpa [#allocation3], 1
    %1956 = vsyncpa [#allocation4], 1

</llo_original>
